<compile_context>
chip_gen: v5e
topology: v5e:2x2
jax: 0.10.0
libtpu: 0.0.40
codegen_flags: <defaults>
</compile_context>

<pallas_src>
import math
import functools

import jax
import jax.numpy as jnp
import numpy as np
from jax import lax
from jax.experimental import pallas as pl
from jax.experimental.pallas import tpu as pltpu


def _leaky(x, slope=0.01):
    return jnp.where(x > 0, x, slope * x)


def _agt_kernel(h_ref, wl_ref, wr_ref, alw_ref, arw_ref, wf_ref,
                g_ref, b_ref, out_ref, *, nheads, head_dim, eps):
    x = h_ref[0]                                                       # [N, D]
    n, d = x.shape

    # Q/K projections: two MXU matmuls over the full model dim.
    fl = jnp.dot(x, wl_ref[...], preferred_element_type=jnp.float32)   # [N, D]
    fr = jnp.dot(x, wr_ref[...], preferred_element_type=jnp.float32)   # [N, D]
    lfl = _leaky(fl)
    lfr = _leaky(fr)

    fh = jnp.zeros((n, d), jnp.float32)
    for hh in range(nheads):                       # static, fully unrolled
        lo = hh * head_dim
        hi = lo + head_dim
        lfl_h = lfl[:, lo:hi]                                          # [N, Dh]
        lfr_h = lfr[:, lo:hi]                                          # [N, Dh]
        fr_h = fr[:, lo:hi]                                            # [N, Dh]

        # Additive attention logits; 1/temper is pre-folded into alw/arw.
        al_col = jnp.dot(lfl_h, alw_ref[...],
                         preferred_element_type=jnp.float32)           # [N, 1]
        # [1, Dh] x [N, Dh] contracted over Dh -> [1, N] (trans-B pattern,
        # native on the MXU; no transpose materialized).
        ar_row = lax.dot_general(arw_ref[...], lfr_h,
                                 (((1,), (1,)), ((), ())),
                                 preferred_element_type=jnp.float32)   # [1, N]
        s = al_col + ar_row                                            # [N, N]

        # Numerically-stable softmax over the last axis.
        s = s - jnp.max(s, axis=-1, keepdims=True)
        p = jnp.exp(s)
        p = p * pl.reciprocal(jnp.sum(p, axis=-1, keepdims=True), approx=True)
        # TODO(synk): att_dropout (dropout1) omitted -- eval mode (identity).

        ctx = jnp.dot(p, fr_h, preferred_element_type=jnp.float32)     # [N, Dh]
        # Accumulate this head's slice of linear_final directly into fh.
        fh = fh + jnp.dot(ctx, wf_ref[lo:hi, :],
                          preferred_element_type=jnp.float32)          # [N, D]

    # TODO(synk): emb_dropout (dropout2) omitted -- eval mode (identity).
    y = x + fh                                                         # residual
    mu = jnp.mean(y, axis=-1, keepdims=True)
    yc = y - mu
    var = jnp.mean(yc * yc, axis=-1, keepdims=True)
    inv = lax.rsqrt(var + eps)
    out_ref[0] = (yc * inv * g_ref[...] + b_ref[...]).astype(out_ref.dtype)


def agt_layer_forward(h, w_l, w_r, att_l_w, att_r_w, w_f, ln_gamma, ln_beta,
                      *, nheads, temper=1.0, eps=1e-5):
    """Forward pass of AGTLayer (rh=None path, eval mode)."""
    # TODO(synk): optional relational path (rl=True, rh/r_source/r_target) not
    # implemented; forward assumes rh=None as in the default call.
    B, N, D = h.shape
    head_dim = D // nheads

    # Fold 1/temper into the attention projection vectors (scores are linear
    # in them), so the kernel never touches temper.
    alw = (att_l_w / temper).reshape(head_dim, 1).astype(jnp.float32)
    arw = (att_r_w / temper).reshape(1, head_dim).astype(jnp.float32)
    gamma = ln_gamma.reshape(1, D).astype(jnp.float32)
    beta = ln_beta.reshape(1, D).astype(jnp.float32)

    kernel = functools.partial(_agt_kernel, nheads=nheads,
                               head_dim=head_dim, eps=eps)

    batch_spec = pl.BlockSpec((1, N, D), lambda b: (b, 0, 0))

    def full2(r, c):
        # Whole (small) array resident in VMEM, same block for every grid step.
        return pl.BlockSpec((r, c), lambda b: (0, 0))

    return pl.pallas_call(
        kernel,
        out_shape=jax.ShapeDtypeStruct((B, N, D), jnp.float32),
        grid=(B,),
        in_specs=[batch_spec,
                  full2(D, D),            # W_l
                  full2(D, D),            # W_r
                  full2(head_dim, 1),     # att_l weight (already /temper)
                  full2(1, head_dim),     # att_r weight (already /temper)
                  full2(D, D),            # W_final
                  full2(1, D),            # LN gamma
                  full2(1, D)],           # LN beta
        out_specs=batch_spec,
        compiler_params=pltpu.CompilerParams(
            dimension_semantics=("parallel",)),
    )(h, w_l, w_r, alw, arw, w_f, gamma, beta)


def agt_reference(h, w_l, w_r, att_l_w, att_r_w, w_f, ln_gamma, ln_beta,
                  *, nheads, temper=1.0, eps=1e-5):
    """Pure-JAX mirror of AGTLayer.forward (eval mode, rh=None)."""
    B, N, D = h.shape
    Dh = D // nheads
    fl = (h @ w_l).reshape(B, N, nheads, Dh).transpose(0, 2, 1, 3)     # [B,H,N,Dh]
    fr = (h @ w_r).reshape(B, N, nheads, Dh).transpose(0, 2, 1, 3)
    leaky = lambda x: jnp.where(x > 0, x, 0.01 * x)
    score_l = leaky(fl) @ att_l_w.reshape(Dh, 1)                       # [B,H,N,1]
    score_r = leaky(fr) @ att_r_w.reshape(Dh, 1)                       # [B,H,N,1]
    score = score_l + jnp.swapaxes(score_r, -1, -2)                    # [B,H,N,N]
    score = score / temper
    score = jax.nn.softmax(score, axis=-1)
    context = score @ fr                                               # [B,H,N,Dh]
    h_sa = context.transpose(0, 2, 1, 3).reshape(B, N, nheads * Dh)
    fh = h_sa @ w_f
    y = h + fh
    mu = y.mean(-1, keepdims=True)
    var = ((y - mu) ** 2).mean(-1, keepdims=True)
    return (y - mu) / jnp.sqrt(var + eps) * ln_gamma + ln_beta


if __name__ == "__main__":
    key = jax.random.PRNGKey(0)
    B, N, D, H = 2, 16, 128, 4          # batch, tokens, embeddings_dimension, nheads
    Dh = D // H
    temper = 1.0

    ks = jax.random.split(key, 6)
    h = jax.random.normal(ks[0], (B, N, D), jnp.float32)
    lim = 1.0 / math.sqrt(D)
    w_l = jax.random.uniform(ks[1], (D, D), jnp.float32, -lim, lim)
    w_r = jax.random.uniform(ks[2], (D, D), jnp.float32, -lim, lim)
    w_f = jax.random.uniform(ks[3], (D, D), jnp.float32, -lim, lim)
    lim_a = 1.0 / math.sqrt(Dh)
    att_l_w = jax.random.uniform(ks[4], (Dh,), jnp.float32, -lim_a, lim_a)
    att_r_w = jax.random.uniform(ks[5], (Dh,), jnp.float32, -lim_a, lim_a)
    ln_gamma = jnp.ones((D,), jnp.float32)      # LayerNorm default init
    ln_beta = jnp.zeros((D,), jnp.float32)

    out = agt_layer_forward(h, w_l, w_r, att_l_w, att_r_w, w_f,
                            ln_gamma, ln_beta, nheads=H, temper=temper)
    out = jax.block_until_ready(out)

    ref = agt_reference(h, w_l, w_r, att_l_w, att_r_w, w_f, ln_gamma, ln_beta,
                        nheads=H, temper=temper)
    np.testing.assert_allclose(np.asarray(out), np.asarray(ref),
                               rtol=2e-3, atol=2e-3)
    print("KERNEL_OK")
</pallas_src>

<mosaic_0001>
module attributes {stable_mosaic.version = 11 : i64} {
  func.func @_agt_kernel(%arg0: i32, %arg1: memref<1x16x128xf32, #tpu.memory_space<vmem>>, %arg2: memref<128x128xf32, #tpu.memory_space<vmem>>, %arg3: memref<128x128xf32, #tpu.memory_space<vmem>>, %arg4: memref<32x1xf32, #tpu.memory_space<vmem>>, %arg5: memref<1x32xf32, #tpu.memory_space<vmem>>, %arg6: memref<128x128xf32, #tpu.memory_space<vmem>>, %arg7: memref<1x128xf32, #tpu.memory_space<vmem>>, %arg8: memref<1x128xf32, #tpu.memory_space<vmem>>, %arg9: memref<1x16x128xf32, #tpu.memory_space<vmem>>) attributes {dimension_semantics = [#tpu.dimension_semantics<parallel>], iteration_bounds = array<i64: 2>, scalar_prefetch = 0 : i64, scratch_operands = 0 : i64, tpu.core_type = #tpu.core_type<tc>, window_params = [{transform_indices = @transform_0, window_bounds = array<i64: 1, 16, 128>}, {pipeline_mode = #tpu.pipeline_mode<synchronous>, transform_indices = @transform_1, window_bounds = array<i64: 128, 128>}, {pipeline_mode = #tpu.pipeline_mode<synchronous>, transform_indices = @transform_2, window_bounds = array<i64: 128, 128>}, {pipeline_mode = #tpu.pipeline_mode<synchronous>, transform_indices = @transform_3, window_bounds = array<i64: 32, 1>}, {pipeline_mode = #tpu.pipeline_mode<synchronous>, transform_indices = @transform_4, window_bounds = array<i64: 1, 32>}, {pipeline_mode = #tpu.pipeline_mode<synchronous>, transform_indices = @transform_5, window_bounds = array<i64: 128, 128>}, {pipeline_mode = #tpu.pipeline_mode<synchronous>, transform_indices = @transform_6, window_bounds = array<i64: 1, 128>}, {pipeline_mode = #tpu.pipeline_mode<synchronous>, transform_indices = @transform_7, window_bounds = array<i64: 1, 128>}, {transform_indices = @transform_8, window_bounds = array<i64: 1, 16, 128>}]} {
    %c0 = arith.constant 0 : index
    %c0_0 = arith.constant 0 : index
    %c0_1 = arith.constant 0 : index
    %0 = vector.load %arg1[%c0, %c0_0, %c0_1] : memref<1x16x128xf32, #tpu.memory_space<vmem>>, vector<1x16x128xf32>
    %1 = vector.shape_cast %0 : vector<1x16x128xf32> to vector<16x128xf32>
    %c0_2 = arith.constant 0 : index
    %c0_3 = arith.constant 0 : index
    %2 = vector.load %arg2[%c0_2, %c0_3] : memref<128x128xf32, #tpu.memory_space<vmem>>, vector<128x128xf32>
    %cst = arith.constant dense<0.000000e+00> : vector<16x128xf32>
    %3 = tpu.matmul %1, %2, %cst {dimension_numbers = #tpu.dot_dimension_numbers<[1], [0], [0], [1], [0, 0, 1, 1], [], []>} : vector<16x128xf32>, vector<128x128xf32>, vector<16x128xf32> -> vector<16x128xf32>
    %c0_4 = arith.constant 0 : index
    %c0_5 = arith.constant 0 : index
    %4 = vector.load %arg3[%c0_4, %c0_5] : memref<128x128xf32, #tpu.memory_space<vmem>>, vector<128x128xf32>
    %cst_6 = arith.constant dense<0.000000e+00> : vector<16x128xf32>
    %5 = tpu.matmul %1, %4, %cst_6 {dimension_numbers = #tpu.dot_dimension_numbers<[1], [0], [0], [1], [0, 0, 1, 1], [], []>} : vector<16x128xf32>, vector<128x128xf32>, vector<16x128xf32> -> vector<16x128xf32>
    %cst_7 = arith.constant 0.000000e+00 : f32
    %6 = vector.broadcast %cst_7 : f32 to vector<16x128xf32>
    %7 = arith.cmpf ogt, %3, %6 : vector<16x128xf32>
    %cst_8 = arith.constant 0.00999999977 : f32
    %8 = vector.broadcast %cst_8 : f32 to vector<16x128xf32>
    %9 = arith.mulf %8, %3 : vector<16x128xf32>
    %10 = arith.select %7, %3, %9 : vector<16x128xi1>, vector<16x128xf32>
    %cst_9 = arith.constant 0.000000e+00 : f32
    %11 = vector.broadcast %cst_9 : f32 to vector<16x128xf32>
    %12 = arith.cmpf ogt, %5, %11 : vector<16x128xf32>
    %cst_10 = arith.constant 0.00999999977 : f32
    %13 = vector.broadcast %cst_10 : f32 to vector<16x128xf32>
    %14 = arith.mulf %13, %5 : vector<16x128xf32>
    %15 = arith.select %12, %5, %14 : vector<16x128xi1>, vector<16x128xf32>
    %cst_11 = arith.constant 0.000000e+00 : f32
    %16 = vector.broadcast %cst_11 : f32 to vector<16x128xf32>
    %17 = vector.extract_strided_slice %10 {offsets = [0, 0], sizes = [16, 32], strides = [1, 1]} : vector<16x128xf32> to vector<16x32xf32>
    %18 = vector.extract_strided_slice %15 {offsets = [0, 0], sizes = [16, 32], strides = [1, 1]} : vector<16x128xf32> to vector<16x32xf32>
    %19 = vector.extract_strided_slice %5 {offsets = [0, 0], sizes = [16, 32], strides = [1, 1]} : vector<16x128xf32> to vector<16x32xf32>
    %c0_12 = arith.constant 0 : index
    %c0_13 = arith.constant 0 : index
    %20 = vector.load %arg4[%c0_12, %c0_13] : memref<32x1xf32, #tpu.memory_space<vmem>>, vector<32x1xf32>
    %cst_14 = arith.constant dense<0.000000e+00> : vector<16x1xf32>
    %21 = tpu.matmul %17, %20, %cst_14 {dimension_numbers = #tpu.dot_dimension_numbers<[1], [0], [0], [1], [0, 0, 1, 1], [], []>} : vector<16x32xf32>, vector<32x1xf32>, vector<16x1xf32> -> vector<16x1xf32>
    %c0_15 = arith.constant 0 : index
    %c0_16 = arith.constant 0 : index
    %22 = vector.load %arg5[%c0_15, %c0_16] : memref<1x32xf32, #tpu.memory_space<vmem>>, vector<1x32xf32>
    %cst_17 = arith.constant dense<0.000000e+00> : vector<1x16xf32>
    %23 = tpu.matmul %22, %18, %cst_17 {dimension_numbers = #tpu.dot_dimension_numbers<[1], [1], [0], [0], [0, 0, 1, 0], [], []>} : vector<1x32xf32>, vector<16x32xf32>, vector<1x16xf32> -> vector<1x16xf32>
    %24 = vector.broadcast %21 : vector<16x1xf32> to vector<16x16xf32>
    %25 = vector.broadcast %23 : vector<1x16xf32> to vector<16x16xf32>
    %26 = arith.addf %24, %25 : vector<16x16xf32>
    %cst_18 = arith.constant dense<0xFF800000> : vector<16xf32>
    %27 = vector.multi_reduction <maximumf>, %26, %cst_18 [1] : vector<16x16xf32> to vector<16xf32>
    %28 = vector.shape_cast %27 : vector<16xf32> to vector<16x1xf32>
    %29 = vector.broadcast %28 : vector<16x1xf32> to vector<16x16xf32>
    %30 = arith.subf %26, %29 : vector<16x16xf32>
    %31 = math.exp %30 : vector<16x16xf32>
    %cst_19 = arith.constant dense<0.000000e+00> : vector<16xf32>
    %32 = vector.multi_reduction <add>, %31, %cst_19 [1] : vector<16x16xf32> to vector<16xf32>
    %33 = vector.shape_cast %32 : vector<16xf32> to vector<16x1xf32>
    %34 = tpu.reciprocal %33 {approx = true} : vector<16x1xf32> -> vector<16x1xf32>
    %35 = vector.broadcast %34 : vector<16x1xf32> to vector<16x16xf32>
    %36 = arith.mulf %31, %35 : vector<16x16xf32>
    %cst_20 = arith.constant dense<0.000000e+00> : vector<16x32xf32>
    %37 = tpu.matmul %36, %19, %cst_20 {dimension_numbers = #tpu.dot_dimension_numbers<[1], [0], [0], [1], [0, 0, 1, 1], [], []>} : vector<16x16xf32>, vector<16x32xf32>, vector<16x32xf32> -> vector<16x32xf32>
    %c0_21 = arith.constant 0 : index
    %c0_22 = arith.constant 0 : index
    %38 = vector.load %arg6[%c0_21, %c0_22] : memref<128x128xf32, #tpu.memory_space<vmem>>, vector<32x128xf32>
    %cst_23 = arith.constant dense<0.000000e+00> : vector<16x128xf32>
    %39 = tpu.matmul %37, %38, %cst_23 {dimension_numbers = #tpu.dot_dimension_numbers<[1], [0], [0], [1], [0, 0, 1, 1], [], []>} : vector<16x32xf32>, vector<32x128xf32>, vector<16x128xf32> -> vector<16x128xf32>
    %40 = arith.addf %16, %39 : vector<16x128xf32>
    %41 = vector.extract_strided_slice %10 {offsets = [0, 32], sizes = [16, 32], strides = [1, 1]} : vector<16x128xf32> to vector<16x32xf32>
    %42 = vector.extract_strided_slice %15 {offsets = [0, 32], sizes = [16, 32], strides = [1, 1]} : vector<16x128xf32> to vector<16x32xf32>
    %43 = vector.extract_strided_slice %5 {offsets = [0, 32], sizes = [16, 32], strides = [1, 1]} : vector<16x128xf32> to vector<16x32xf32>
    %c0_24 = arith.constant 0 : index
    %c0_25 = arith.constant 0 : index
    %44 = vector.load %arg4[%c0_24, %c0_25] : memref<32x1xf32, #tpu.memory_space<vmem>>, vector<32x1xf32>
    %cst_26 = arith.constant dense<0.000000e+00> : vector<16x1xf32>
    %45 = tpu.matmul %41, %44, %cst_26 {dimension_numbers = #tpu.dot_dimension_numbers<[1], [0], [0], [1], [0, 0, 1, 1], [], []>} : vector<16x32xf32>, vector<32x1xf32>, vector<16x1xf32> -> vector<16x1xf32>
    %c0_27 = arith.constant 0 : index
    %c0_28 = arith.constant 0 : index
    %46 = vector.load %arg5[%c0_27, %c0_28] : memref<1x32xf32, #tpu.memory_space<vmem>>, vector<1x32xf32>
    %cst_29 = arith.constant dense<0.000000e+00> : vector<1x16xf32>
    %47 = tpu.matmul %46, %42, %cst_29 {dimension_numbers = #tpu.dot_dimension_numbers<[1], [1], [0], [0], [0, 0, 1, 0], [], []>} : vector<1x32xf32>, vector<16x32xf32>, vector<1x16xf32> -> vector<1x16xf32>
    %48 = vector.broadcast %45 : vector<16x1xf32> to vector<16x16xf32>
    %49 = vector.broadcast %47 : vector<1x16xf32> to vector<16x16xf32>
    %50 = arith.addf %48, %49 : vector<16x16xf32>
    %cst_30 = arith.constant dense<0xFF800000> : vector<16xf32>
    %51 = vector.multi_reduction <maximumf>, %50, %cst_30 [1] : vector<16x16xf32> to vector<16xf32>
    %52 = vector.shape_cast %51 : vector<16xf32> to vector<16x1xf32>
    %53 = vector.broadcast %52 : vector<16x1xf32> to vector<16x16xf32>
    %54 = arith.subf %50, %53 : vector<16x16xf32>
    %55 = math.exp %54 : vector<16x16xf32>
    %cst_31 = arith.constant dense<0.000000e+00> : vector<16xf32>
    %56 = vector.multi_reduction <add>, %55, %cst_31 [1] : vector<16x16xf32> to vector<16xf32>
    %57 = vector.shape_cast %56 : vector<16xf32> to vector<16x1xf32>
    %58 = tpu.reciprocal %57 {approx = true} : vector<16x1xf32> -> vector<16x1xf32>
    %59 = vector.broadcast %58 : vector<16x1xf32> to vector<16x16xf32>
    %60 = arith.mulf %55, %59 : vector<16x16xf32>
    %cst_32 = arith.constant dense<0.000000e+00> : vector<16x32xf32>
    %61 = tpu.matmul %60, %43, %cst_32 {dimension_numbers = #tpu.dot_dimension_numbers<[1], [0], [0], [1], [0, 0, 1, 1], [], []>} : vector<16x16xf32>, vector<16x32xf32>, vector<16x32xf32> -> vector<16x32xf32>
    %c32 = arith.constant 32 : index
    %c0_33 = arith.constant 0 : index
    %62 = vector.load %arg6[%c32, %c0_33] : memref<128x128xf32, #tpu.memory_space<vmem>>, vector<32x128xf32>
    %cst_34 = arith.constant dense<0.000000e+00> : vector<16x128xf32>
    %63 = tpu.matmul %61, %62, %cst_34 {dimension_numbers = #tpu.dot_dimension_numbers<[1], [0], [0], [1], [0, 0, 1, 1], [], []>} : vector<16x32xf32>, vector<32x128xf32>, vector<16x128xf32> -> vector<16x128xf32>
    %64 = arith.addf %40, %63 : vector<16x128xf32>
    %65 = vector.extract_strided_slice %10 {offsets = [0, 64], sizes = [16, 32], strides = [1, 1]} : vector<16x128xf32> to vector<16x32xf32>
    %66 = vector.extract_strided_slice %15 {offsets = [0, 64], sizes = [16, 32], strides = [1, 1]} : vector<16x128xf32> to vector<16x32xf32>
    %67 = vector.extract_strided_slice %5 {offsets = [0, 64], sizes = [16, 32], strides = [1, 1]} : vector<16x128xf32> to vector<16x32xf32>
    %c0_35 = arith.constant 0 : index
    %c0_36 = arith.constant 0 : index
    %68 = vector.load %arg4[%c0_35, %c0_36] : memref<32x1xf32, #tpu.memory_space<vmem>>, vector<32x1xf32>
    %cst_37 = arith.constant dense<0.000000e+00> : vector<16x1xf32>
    %69 = tpu.matmul %65, %68, %cst_37 {dimension_numbers = #tpu.dot_dimension_numbers<[1], [0], [0], [1], [0, 0, 1, 1], [], []>} : vector<16x32xf32>, vector<32x1xf32>, vector<16x1xf32> -> vector<16x1xf32>
    %c0_38 = arith.constant 0 : index
    %c0_39 = arith.constant 0 : index
    %70 = vector.load %arg5[%c0_38, %c0_39] : memref<1x32xf32, #tpu.memory_space<vmem>>, vector<1x32xf32>
    %cst_40 = arith.constant dense<0.000000e+00> : vector<1x16xf32>
    %71 = tpu.matmul %70, %66, %cst_40 {dimension_numbers = #tpu.dot_dimension_numbers<[1], [1], [0], [0], [0, 0, 1, 0], [], []>} : vector<1x32xf32>, vector<16x32xf32>, vector<1x16xf32> -> vector<1x16xf32>
    %72 = vector.broadcast %69 : vector<16x1xf32> to vector<16x16xf32>
    %73 = vector.broadcast %71 : vector<1x16xf32> to vector<16x16xf32>
    %74 = arith.addf %72, %73 : vector<16x16xf32>
    %cst_41 = arith.constant dense<0xFF800000> : vector<16xf32>
    %75 = vector.multi_reduction <maximumf>, %74, %cst_41 [1] : vector<16x16xf32> to vector<16xf32>
    %76 = vector.shape_cast %75 : vector<16xf32> to vector<16x1xf32>
    %77 = vector.broadcast %76 : vector<16x1xf32> to vector<16x16xf32>
    %78 = arith.subf %74, %77 : vector<16x16xf32>
    %79 = math.exp %78 : vector<16x16xf32>
    %cst_42 = arith.constant dense<0.000000e+00> : vector<16xf32>
    %80 = vector.multi_reduction <add>, %79, %cst_42 [1] : vector<16x16xf32> to vector<16xf32>
    %81 = vector.shape_cast %80 : vector<16xf32> to vector<16x1xf32>
    %82 = tpu.reciprocal %81 {approx = true} : vector<16x1xf32> -> vector<16x1xf32>
    %83 = vector.broadcast %82 : vector<16x1xf32> to vector<16x16xf32>
    %84 = arith.mulf %79, %83 : vector<16x16xf32>
    %cst_43 = arith.constant dense<0.000000e+00> : vector<16x32xf32>
    %85 = tpu.matmul %84, %67, %cst_43 {dimension_numbers = #tpu.dot_dimension_numbers<[1], [0], [0], [1], [0, 0, 1, 1], [], []>} : vector<16x16xf32>, vector<16x32xf32>, vector<16x32xf32> -> vector<16x32xf32>
    %c64 = arith.constant 64 : index
    %c0_44 = arith.constant 0 : index
    %86 = vector.load %arg6[%c64, %c0_44] : memref<128x128xf32, #tpu.memory_space<vmem>>, vector<32x128xf32>
    %cst_45 = arith.constant dense<0.000000e+00> : vector<16x128xf32>
    %87 = tpu.matmul %85, %86, %cst_45 {dimension_numbers = #tpu.dot_dimension_numbers<[1], [0], [0], [1], [0, 0, 1, 1], [], []>} : vector<16x32xf32>, vector<32x128xf32>, vector<16x128xf32> -> vector<16x128xf32>
    %88 = arith.addf %64, %87 : vector<16x128xf32>
    %89 = vector.extract_strided_slice %10 {offsets = [0, 96], sizes = [16, 32], strides = [1, 1]} : vector<16x128xf32> to vector<16x32xf32>
    %90 = vector.extract_strided_slice %15 {offsets = [0, 96], sizes = [16, 32], strides = [1, 1]} : vector<16x128xf32> to vector<16x32xf32>
    %91 = vector.extract_strided_slice %5 {offsets = [0, 96], sizes = [16, 32], strides = [1, 1]} : vector<16x128xf32> to vector<16x32xf32>
    %c0_46 = arith.constant 0 : index
    %c0_47 = arith.constant 0 : index
    %92 = vector.load %arg4[%c0_46, %c0_47] : memref<32x1xf32, #tpu.memory_space<vmem>>, vector<32x1xf32>
    %cst_48 = arith.constant dense<0.000000e+00> : vector<16x1xf32>
    %93 = tpu.matmul %89, %92, %cst_48 {dimension_numbers = #tpu.dot_dimension_numbers<[1], [0], [0], [1], [0, 0, 1, 1], [], []>} : vector<16x32xf32>, vector<32x1xf32>, vector<16x1xf32> -> vector<16x1xf32>
    %c0_49 = arith.constant 0 : index
    %c0_50 = arith.constant 0 : index
    %94 = vector.load %arg5[%c0_49, %c0_50] : memref<1x32xf32, #tpu.memory_space<vmem>>, vector<1x32xf32>
    %cst_51 = arith.constant dense<0.000000e+00> : vector<1x16xf32>
    %95 = tpu.matmul %94, %90, %cst_51 {dimension_numbers = #tpu.dot_dimension_numbers<[1], [1], [0], [0], [0, 0, 1, 0], [], []>} : vector<1x32xf32>, vector<16x32xf32>, vector<1x16xf32> -> vector<1x16xf32>
    %96 = vector.broadcast %93 : vector<16x1xf32> to vector<16x16xf32>
    %97 = vector.broadcast %95 : vector<1x16xf32> to vector<16x16xf32>
    %98 = arith.addf %96, %97 : vector<16x16xf32>
    %cst_52 = arith.constant dense<0xFF800000> : vector<16xf32>
    %99 = vector.multi_reduction <maximumf>, %98, %cst_52 [1] : vector<16x16xf32> to vector<16xf32>
    %100 = vector.shape_cast %99 : vector<16xf32> to vector<16x1xf32>
    %101 = vector.broadcast %100 : vector<16x1xf32> to vector<16x16xf32>
    %102 = arith.subf %98, %101 : vector<16x16xf32>
    %103 = math.exp %102 : vector<16x16xf32>
    %cst_53 = arith.constant dense<0.000000e+00> : vector<16xf32>
    %104 = vector.multi_reduction <add>, %103, %cst_53 [1] : vector<16x16xf32> to vector<16xf32>
    %105 = vector.shape_cast %104 : vector<16xf32> to vector<16x1xf32>
    %106 = tpu.reciprocal %105 {approx = true} : vector<16x1xf32> -> vector<16x1xf32>
    %107 = vector.broadcast %106 : vector<16x1xf32> to vector<16x16xf32>
    %108 = arith.mulf %103, %107 : vector<16x16xf32>
    %cst_54 = arith.constant dense<0.000000e+00> : vector<16x32xf32>
    %109 = tpu.matmul %108, %91, %cst_54 {dimension_numbers = #tpu.dot_dimension_numbers<[1], [0], [0], [1], [0, 0, 1, 1], [], []>} : vector<16x16xf32>, vector<16x32xf32>, vector<16x32xf32> -> vector<16x32xf32>
    %c96 = arith.constant 96 : index
    %c0_55 = arith.constant 0 : index
    %110 = vector.load %arg6[%c96, %c0_55] : memref<128x128xf32, #tpu.memory_space<vmem>>, vector<32x128xf32>
    %cst_56 = arith.constant dense<0.000000e+00> : vector<16x128xf32>
    %111 = tpu.matmul %109, %110, %cst_56 {dimension_numbers = #tpu.dot_dimension_numbers<[1], [0], [0], [1], [0, 0, 1, 1], [], []>} : vector<16x32xf32>, vector<32x128xf32>, vector<16x128xf32> -> vector<16x128xf32>
    %112 = arith.addf %88, %111 : vector<16x128xf32>
    %113 = arith.addf %1, %112 : vector<16x128xf32>
    %cst_57 = arith.constant dense<0.000000e+00> : vector<16xf32>
    %114 = vector.multi_reduction <add>, %113, %cst_57 [1] : vector<16x128xf32> to vector<16xf32>
    %115 = vector.shape_cast %114 : vector<16xf32> to vector<16x1xf32>
    %cst_58 = arith.constant 1.280000e+02 : f32
    %116 = vector.broadcast %cst_58 : f32 to vector<16x1xf32>
    %117 = arith.divf %115, %116 : vector<16x1xf32>
    %118 = vector.broadcast %117 : vector<16x1xf32> to vector<16x128xf32>
    %119 = arith.subf %113, %118 : vector<16x128xf32>
    %120 = arith.mulf %119, %119 : vector<16x128xf32>
    %cst_59 = arith.constant dense<0.000000e+00> : vector<16xf32>
    %121 = vector.multi_reduction <add>, %120, %cst_59 [1] : vector<16x128xf32> to vector<16xf32>
    %122 = vector.shape_cast %121 : vector<16xf32> to vector<16x1xf32>
    %cst_60 = arith.constant 1.280000e+02 : f32
    %123 = vector.broadcast %cst_60 : f32 to vector<16x1xf32>
    %124 = arith.divf %122, %123 : vector<16x1xf32>
    %cst_61 = arith.constant 9.99999974E-6 : f32
    %125 = vector.broadcast %cst_61 : f32 to vector<16x1xf32>
    %126 = arith.addf %124, %125 : vector<16x1xf32>
    %127 = math.rsqrt %126 : vector<16x1xf32>
    %128 = vector.broadcast %127 : vector<16x1xf32> to vector<16x128xf32>
    %129 = arith.mulf %119, %128 : vector<16x128xf32>
    %c0_62 = arith.constant 0 : index
    %c0_63 = arith.constant 0 : index
    %130 = vector.load %arg7[%c0_62, %c0_63] : memref<1x128xf32, #tpu.memory_space<vmem>>, vector<1x128xf32>
    %131 = vector.broadcast %130 : vector<1x128xf32> to vector<16x128xf32>
    %132 = arith.mulf %129, %131 : vector<16x128xf32>
    %c0_64 = arith.constant 0 : index
    %c0_65 = arith.constant 0 : index
    %133 = vector.load %arg8[%c0_64, %c0_65] : memref<1x128xf32, #tpu.memory_space<vmem>>, vector<1x128xf32>
    %134 = vector.broadcast %133 : vector<1x128xf32> to vector<16x128xf32>
    %135 = arith.addf %132, %134 : vector<16x128xf32>
    %c0_66 = arith.constant 0 : index
    %c0_67 = arith.constant 0 : index
    %c0_68 = arith.constant 0 : index
    %136 = vector.load %arg9[%c0_66, %c0_67, %c0_68] : memref<1x16x128xf32, #tpu.memory_space<vmem>>, vector<1x16x128xf32>
    %137 = vector.shape_cast %136 : vector<1x16x128xf32> to vector<16x128xf32>
    %138 = vector.shape_cast %135 : vector<16x128xf32> to vector<1x16x128xf32>
    tpu.vector_store %arg9[%c0_66, %c0_67, %c0_68], %138 {strides = array<i32>} : memref<1x16x128xf32, #tpu.memory_space<vmem>>, vector<1x16x128xf32>,
    return
  }
  func.func @transform_0(%arg0: i32) -> (i32, i32, i32) {
    %c0_i32 = arith.constant 0 : i32
    %c0_i32_0 = arith.constant 0 : i32
    %c0_i32_1 = arith.constant 0 : i32
    return %arg0, %c0_i32, %c0_i32_0 : i32, i32, i32
  }
  func.func @transform_1(%arg0: i32) -> (i32, i32) {
    %c0_i32 = arith.constant 0 : i32
    %c0_i32_0 = arith.constant 0 : i32
    %c0_i32_1 = arith.constant 0 : i32
    return %c0_i32, %c0_i32_0 : i32, i32
  }
  func.func @transform_2(%arg0: i32) -> (i32, i32) {
    %c0_i32 = arith.constant 0 : i32
    %c0_i32_0 = arith.constant 0 : i32
    %c0_i32_1 = arith.constant 0 : i32
    return %c0_i32, %c0_i32_0 : i32, i32
  }
  func.func @transform_3(%arg0: i32) -> (i32, i32) {
    %c0_i32 = arith.constant 0 : i32
    %c0_i32_0 = arith.constant 0 : i32
    %c0_i32_1 = arith.constant 0 : i32
    return %c0_i32, %c0_i32_0 : i32, i32
  }
  func.func @transform_4(%arg0: i32) -> (i32, i32) {
    %c0_i32 = arith.constant 0 : i32
    %c0_i32_0 = arith.constant 0 : i32
    %c0_i32_1 = arith.constant 0 : i32
    return %c0_i32, %c0_i32_0 : i32, i32
  }
  func.func @transform_5(%arg0: i32) -> (i32, i32) {
    %c0_i32 = arith.constant 0 : i32
    %c0_i32_0 = arith.constant 0 : i32
    %c0_i32_1 = arith.constant 0 : i32
    return %c0_i32, %c0_i32_0 : i32, i32
  }
  func.func @transform_6(%arg0: i32) -> (i32, i32) {
    %c0_i32 = arith.constant 0 : i32
    %c0_i32_0 = arith.constant 0 : i32
    %c0_i32_1 = arith.constant 0 : i32
    return %c0_i32, %c0_i32_0 : i32, i32
  }
  func.func @transform_7(%arg0: i32) -> (i32, i32) {
    %c0_i32 = arith.constant 0 : i32
    %c0_i32_0 = arith.constant 0 : i32
    %c0_i32_1 = arith.constant 0 : i32
    return %c0_i32, %c0_i32_0 : i32, i32
  }
  func.func @transform_8(%arg0: i32) -> (i32, i32, i32) {
    %c0_i32 = arith.constant 0 : i32
    %c0_i32_0 = arith.constant 0 : i32
    %c0_i32_1 = arith.constant 0 : i32
    return %arg0, %c0_i32, %c0_i32_0 : i32, i32, i32
  }
}

</mosaic_0001>

<llo_original>
// kernel: tpu_custom_call.1
$region0: #{tpu_custom_call.1}
  #allocation0 [shape = 'u32[]', space=smem, size = 0x4, offset = 0x4, fixed_abs, tag = 'smem constant byte address 0x4 - core index']
  #allocation1 [shape = 'u32[72,128]{1,0:T(1,128)}', space=vmem, size = 0x9000, scoped, tag = 'internal scratch']
  %s0 = inlined_call_operand.vmem [shape: f32[2,16,128], index: 0, kind: input, shape index: {}]
  %s1 = inlined_call_operand.hbm [shape: f32[128,128], index: 1, kind: input, shape index: {}]
  %s2 = inlined_call_operand.hbm [shape: f32[128,128], index: 2, kind: input, shape index: {}]
  %s3 = inlined_call_operand.vmem [shape: f32[32,1], index: 3, kind: input, shape index: {}]
  %s4 = inlined_call_operand.vmem [shape: f32[1,32], index: 4, kind: input, shape index: {}]
  %s5 = inlined_call_operand.hbm [shape: f32[128,128], index: 5, kind: input, shape index: {}]
  %s6 = inlined_call_operand.vmem [shape: f32[1,128], index: 6, kind: input, shape index: {}]
  %s7 = inlined_call_operand.vmem [shape: f32[1,128], index: 7, kind: input, shape index: {}]
  %s8 = inlined_call_operand.hbm [shape: f32[2,16,128], index: 8, kind: output, shape index: {}]
  %s9 = sld [smem:[#allocation0]]
  $region77: #{tpu_custom_call.1} parent=0
    _
  %s11 = ssub.s32 1, %s9
  %s12 = scalar_select 0, %s11, %s9
  $region1: #{tpu_custom_call.1} parent=0
    #allocation2 [shape = 'u8[65536]{0}', space=vmem, size = 0x10000, scoped, tag = 'input window, operand 1, single buffered']
    #allocation3 [shape = 's32[2]{0}', space=sflag, size = 0x8, scoped, tag = 'scoped memory for tpu_custom_call.1']
    #allocation4 [shape = 's32[2]{0}', space=sflag, size = 0x8, scoped, tag = 'scoped memory for tpu_custom_call.1']
    #allocation5 [shape = 'u8[65536]{0}', space=vmem, size = 0x10000, scoped, tag = 'input window, operand 2, single buffered']
    #allocation6 [shape = 's32[1]{0}', space=sflag, size = 0x4, scoped, tag = 'scoped memory for tpu_custom_call.1']
    #allocation7 [shape = 'u8[65536]{0}', space=vmem, size = 0x10000, scoped, tag = 'input window, operand 5, single buffered']
    #allocation8 [shape = 'u8[16384]{0}', space=vmem, size = 0x4000, scoped, tag = 'output window, operand 0']
    %13 = vsyncpa [#allocation3], 0
    %14 = vsyncpa [#allocation6], 0
    %15 = vsyncpa [#allocation4], 0
    %s16 = scalar_lea.sflag [#allocation4], 1
    %17 = vsyncpa %s16, 0
    loop: start=0, step=1, limit=4
    $region2: #{tpu_custom_call.1} parent=1 // loop_pre_header
      _
    $region3: #{tpu_custom_call.1} parent=1 // loop_header
      %s19 = sphi 0, %s23
      %p20 = scmp.ge.s32.totalorder %s19, 4
      %s29 = sphi 0, %s31
      %s32 = sphi 0, %s29
      %s33 = sphi 0, %s32
      %s49 = sphi 0, %s33
      %s53 = sphi 0, %s53
      %s55 = sphi 0, %s53
      %s56 = sphi 0, %s55
      %s70 = sphi 0, %s56
      %s74 = sphi 0, %s74
      %s76 = sphi 0, %s74
      %s77 = sphi 0, %s76
      %s91 = sphi 0, %s77
      %s95 = sphi 0, %s95
      %s97 = sphi 0, %s95
      %s98 = sphi 0, %s97
      %s112 = sphi 0, %s98
      %s116 = sphi 0, %s116
      %s118 = sphi 0, %s116
      %s119 = sphi 0, %s118
      %s133 = sphi 0, %s119
      %s137 = sphi 0, %s137
      %s139 = sphi 0, %s137
      %s140 = sphi 0, %s139
      %s154 = sphi 0, %s140
      %s158 = sphi 0, %s158
      %s160 = sphi 0, %s158
      %s161 = sphi 0, %s160
      %s175 = sphi 0, %s161
      %s179 = sphi 0, %s179
      %s181 = sphi 0, %s179
      %s182 = sphi 0, %s181
      %s196 = sphi 0, %s182
      %s202 = sphi 0, %s204
      %s205 = sphi 0, %s202
      %s206 = sphi 0, %s205
      %s222 = sphi 0, %s206
    $region4: #{tpu_custom_call.1} parent=1 // loop_header_branch
      %22 = sbr.rel (%p20) target = $region8
    $region5: #{tpu_custom_call.1} parent=1 // loop_body
      %s24 = ssub.s32 %s19, 1
      %s25 = ssub.s32 %s19, 2
      %s26 = sadd.s32 %s19, 1
      %s27 = ssub.s32 %s19, %s26
      %p28 = scmp.eq.s32.totalorder %s27, 0
      %s30 = sadd.s32 %s29, 1
      %s31 = scalar_select %p28, %s29, %s30
      %p34 = pneg %p28
      %p35 = scmp.eq.s32.totalorder %s19, 1
      %p36 = por %p34, %p35
      %p37 = scmp.ne.s32.totalorder %s29, %s32
      %p38 = scmp.eq.s32.totalorder %s19, 0
      %p39 = por %p37, %p38
      %p40 = scmp.ne.s32.totalorder %s29, %s32
      %p41 = scmp.eq.s32.totalorder %s24, 1
      %p42 = por %p40, %p41
      %p43 = scmp.ne.s32.totalorder %s32, %s33
      %p44 = scmp.eq.s32.totalorder %s24, 0
      %p45 = por %p43, %p44
      %p46 = scmp.ne.s32.totalorder %s32, %s33
      %p47 = scmp.eq.s32.totalorder %s25, 1
      %p48 = por %p46, %p47
      %p50 = scmp.ne.s32.totalorder %s33, %s49
      %p51 = scmp.eq.s32.totalorder %s25, 0
      %p52 = por %p50, %p51
      %s54 = sadd.s32 %s53, 1
      %p57 = scmp.eq.s32.totalorder %s19, 1
      %p58 = scmp.ne.s32.totalorder %s53, %s55
      %p59 = scmp.eq.s32.totalorder %s19, 0
      %p60 = por %p58, %p59
      %p61 = scmp.ne.s32.totalorder %s53, %s55
      %p62 = scmp.eq.s32.totalorder %s24, 1
      %p63 = por %p61, %p62
      %p64 = scmp.ne.s32.totalorder %s55, %s56
      %p65 = scmp.eq.s32.totalorder %s24, 0
      %p66 = por %p64, %p65
      %p67 = scmp.ne.s32.totalorder %s55, %s56
      %p68 = scmp.eq.s32.totalorder %s25, 1
      %p69 = por %p67, %p68
      %p71 = scmp.ne.s32.totalorder %s56, %s70
      %p72 = scmp.eq.s32.totalorder %s25, 0
      %p73 = por %p71, %p72
      %s75 = sadd.s32 %s74, 1
      %p78 = scmp.eq.s32.totalorder %s19, 1
      %p79 = scmp.ne.s32.totalorder %s74, %s76
      %p80 = scmp.eq.s32.totalorder %s19, 0
      %p81 = por %p79, %p80
      %p82 = scmp.ne.s32.totalorder %s74, %s76
      %p83 = scmp.eq.s32.totalorder %s24, 1
      %p84 = por %p82, %p83
      %p85 = scmp.ne.s32.totalorder %s76, %s77
      %p86 = scmp.eq.s32.totalorder %s24, 0
      %p87 = por %p85, %p86
      %p88 = scmp.ne.s32.totalorder %s76, %s77
      %p89 = scmp.eq.s32.totalorder %s25, 1
      %p90 = por %p88, %p89
      %p92 = scmp.ne.s32.totalorder %s77, %s91
      %p93 = scmp.eq.s32.totalorder %s25, 0
      %p94 = por %p92, %p93
      %s96 = sadd.s32 %s95, 1
      %p99 = scmp.eq.s32.totalorder %s19, 1
      %p100 = scmp.ne.s32.totalorder %s95, %s97
      %p101 = scmp.eq.s32.totalorder %s19, 0
      %p102 = por %p100, %p101
      %p103 = scmp.ne.s32.totalorder %s95, %s97
      %p104 = scmp.eq.s32.totalorder %s24, 1
      %p105 = por %p103, %p104
      %p106 = scmp.ne.s32.totalorder %s97, %s98
      %p107 = scmp.eq.s32.totalorder %s24, 0
      %p108 = por %p106, %p107
      %p109 = scmp.ne.s32.totalorder %s97, %s98
      %p110 = scmp.eq.s32.totalorder %s25, 1
      %p111 = por %p109, %p110
      %p113 = scmp.ne.s32.totalorder %s98, %s112
      %p114 = scmp.eq.s32.totalorder %s25, 0
      %p115 = por %p113, %p114
      %s117 = sadd.s32 %s116, 1
      %p120 = scmp.eq.s32.totalorder %s19, 1
      %p121 = scmp.ne.s32.totalorder %s116, %s118
      %p122 = scmp.eq.s32.totalorder %s19, 0
      %p123 = por %p121, %p122
      %p124 = scmp.ne.s32.totalorder %s116, %s118
      %p125 = scmp.eq.s32.totalorder %s24, 1
      %p126 = por %p124, %p125
      %p127 = scmp.ne.s32.totalorder %s118, %s119
      %p128 = scmp.eq.s32.totalorder %s24, 0
      %p129 = por %p127, %p128
      %p130 = scmp.ne.s32.totalorder %s118, %s119
      %p131 = scmp.eq.s32.totalorder %s25, 1
      %p132 = por %p130, %p131
      %p134 = scmp.ne.s32.totalorder %s119, %s133
      %p135 = scmp.eq.s32.totalorder %s25, 0
      %p136 = por %p134, %p135
      %s138 = sadd.s32 %s137, 1
      %p141 = scmp.eq.s32.totalorder %s19, 1
      %p142 = scmp.ne.s32.totalorder %s137, %s139
      %p143 = scmp.eq.s32.totalorder %s19, 0
      %p144 = por %p142, %p143
      %p145 = scmp.ne.s32.totalorder %s137, %s139
      %p146 = scmp.eq.s32.totalorder %s24, 1
      %p147 = por %p145, %p146
      %p148 = scmp.ne.s32.totalorder %s139, %s140
      %p149 = scmp.eq.s32.totalorder %s24, 0
      %p150 = por %p148, %p149
      %p151 = scmp.ne.s32.totalorder %s139, %s140
      %p152 = scmp.eq.s32.totalorder %s25, 1
      %p153 = por %p151, %p152
      %p155 = scmp.ne.s32.totalorder %s140, %s154
      %p156 = scmp.eq.s32.totalorder %s25, 0
      %p157 = por %p155, %p156
      %s159 = sadd.s32 %s158, 1
      %p162 = scmp.eq.s32.totalorder %s19, 1
      %p163 = scmp.ne.s32.totalorder %s158, %s160
      %p164 = scmp.eq.s32.totalorder %s19, 0
      %p165 = por %p163, %p164
      %p166 = scmp.ne.s32.totalorder %s158, %s160
      %p167 = scmp.eq.s32.totalorder %s24, 1
      %p168 = por %p166, %p167
      %p169 = scmp.ne.s32.totalorder %s160, %s161
      %p170 = scmp.eq.s32.totalorder %s24, 0
      %p171 = por %p169, %p170
      %p172 = scmp.ne.s32.totalorder %s160, %s161
      %p173 = scmp.eq.s32.totalorder %s25, 1
      %p174 = por %p172, %p173
      %p176 = scmp.ne.s32.totalorder %s161, %s175
      %p177 = scmp.eq.s32.totalorder %s25, 0
      %p178 = por %p176, %p177
      %s180 = sadd.s32 %s179, 1
      %p183 = scmp.eq.s32.totalorder %s19, 1
      %p184 = scmp.ne.s32.totalorder %s179, %s181
      %p185 = scmp.eq.s32.totalorder %s19, 0
      %p186 = por %p184, %p185
      %p187 = scmp.ne.s32.totalorder %s179, %s181
      %p188 = scmp.eq.s32.totalorder %s24, 1
      %p189 = por %p187, %p188
      %p190 = scmp.ne.s32.totalorder %s181, %s182
      %p191 = scmp.eq.s32.totalorder %s24, 0
      %p192 = por %p190, %p191
      %p193 = scmp.ne.s32.totalorder %s181, %s182
      %p194 = scmp.eq.s32.totalorder %s25, 1
      %p195 = por %p193, %p194
      %p197 = scmp.ne.s32.totalorder %s182, %s196
      %p198 = scmp.eq.s32.totalorder %s25, 0
      %p199 = por %p197, %p198
      %s200 = ssub.s32 %s19, %s26
      %p201 = scmp.eq.s32.totalorder %s200, 0
      %s203 = sadd.s32 %s202, 1
      %s204 = scalar_select %p201, %s202, %s203
      %p207 = pneg %p201
      %p208 = scmp.eq.s32.totalorder %s19, 1
      %p209 = por %p207, %p208
      %p210 = scmp.ne.s32.totalorder %s202, %s205
      %p211 = scmp.eq.s32.totalorder %s19, 0
      %p212 = por %p210, %p211
      %p213 = scmp.ne.s32.totalorder %s202, %s205
      %p214 = scmp.eq.s32.totalorder %s24, 1
      %p215 = por %p213, %p214
      %p216 = scmp.ne.s32.totalorder %s205, %s206
      %p217 = scmp.eq.s32.totalorder %s24, 0
      %p218 = por %p216, %p217
      %p219 = scmp.ne.s32.totalorder %s205, %s206
      %p220 = scmp.eq.s32.totalorder %s25, 1
      %p221 = por %p219, %p220
      %p223 = scmp.ne.s32.totalorder %s206, %s222
      %p224 = scmp.eq.s32.totalorder %s25, 0
      %p225 = por %p223, %p224
      %p226 = scmp.le.s32.totalorder 1, %s19
      %p227 = scmp.lt.s32.totalorder %s19, 3
      %p228 = pnand %p226, %p227
      %p229 = pneg %p228
      // Predicated region
      $region9: #{tpu_custom_call.1} parent=5 // pred_check
        _
      $region10: #{tpu_custom_call.1} parent=5 // pred_check_branch
        %231 = sbr.rel (%p228) target = $region12
      $region11: #{tpu_custom_call.1} parent=5 // pred_region
        %s232 = ssub.s32 %s19, 1
        // Predicated region
        $region13: #{tpu_custom_call.1} parent=11 // pred_check
          %p233 = pneg %p66
        $region14: #{tpu_custom_call.1} parent=11 // pred_check_branch
          %235 = sbr.rel (%p233) target = $region16
        $region15: #{tpu_custom_call.1} parent=11 // pred_region
          %237 = vsyncadd [#allocation3], 0
          %s238 = sshll.u32 %s1, 4
          %s239 = int_to_ptr.hbm [resolvable:$true] %s238
          %s240 = sshll.u32 [#allocation2], 4
          %s241 = int_to_ptr.vmem [resolvable:$true] %s240
          %246 = dma.hbm_to_vmem [thread:$0]  %s239, 2048, %s241, [#allocation3], 128, 128, 8
        $region16: #{tpu_custom_call.1} parent=11 // pred_fallthru
          _
        // Predicated region
        $region17: #{tpu_custom_call.1} parent=11 // pred_check
          %p247 = pneg %p87
        $region18: #{tpu_custom_call.1} parent=11 // pred_check_branch
          %249 = sbr.rel (%p247) target = $region20
        $region19: #{tpu_custom_call.1} parent=11 // pred_region
          %251 = vsyncadd [#allocation6], 0
          %s252 = sshll.u32 %s2, 4
          %s253 = int_to_ptr.hbm [resolvable:$true] %s252
          %s254 = sshll.u32 [#allocation5], 4
          %s255 = int_to_ptr.vmem [resolvable:$true] %s254
          %260 = dma.hbm_to_vmem [thread:$0]  %s253, 2048, %s255, [#allocation6], 128, 128, 8
        $region20: #{tpu_custom_call.1} parent=11 // pred_fallthru
          _
        // Predicated region
        $region21: #{tpu_custom_call.1} parent=11 // pred_check
          %p261 = pneg %p108
        $region22: #{tpu_custom_call.1} parent=11 // pred_check_branch
          %263 = sbr.rel (%p261) target = $region24
        $region23: #{tpu_custom_call.1} parent=11 // pred_region
          _
        $region24: #{tpu_custom_call.1} parent=11 // pred_fallthru
          _
        // Predicated region
        $region25: #{tpu_custom_call.1} parent=11 // pred_check
          %p264 = pneg %p129
        $region26: #{tpu_custom_call.1} parent=11 // pred_check_branch
          %266 = sbr.rel (%p264) target = $region28
        $region27: #{tpu_custom_call.1} parent=11 // pred_region
          _
        $region28: #{tpu_custom_call.1} parent=11 // pred_fallthru
          _
        // Predicated region
        $region29: #{tpu_custom_call.1} parent=11 // pred_check
          %p267 = pneg %p150
        $region30: #{tpu_custom_call.1} parent=11 // pred_check_branch
          %269 = sbr.rel (%p267) target = $region32
        $region31: #{tpu_custom_call.1} parent=11 // pred_region
          %271 = vsyncadd [#allocation6], 0
          %s272 = sshll.u32 %s5, 4
          %s273 = int_to_ptr.hbm [resolvable:$true] %s272
          %s274 = sshll.u32 [#allocation7], 4
          %s275 = int_to_ptr.vmem [resolvable:$true] %s274
          %280 = dma.hbm_to_vmem [thread:$0]  %s273, 2048, %s275, [#allocation6], 128, 128, 8
        $region32: #{tpu_custom_call.1} parent=11 // pred_fallthru
          _
        // Predicated region
        $region33: #{tpu_custom_call.1} parent=11 // pred_check
          %p281 = pneg %p171
        $region34: #{tpu_custom_call.1} parent=11 // pred_check_branch
          %283 = sbr.rel (%p281) target = $region36
        $region35: #{tpu_custom_call.1} parent=11 // pred_region
          _
        $region36: #{tpu_custom_call.1} parent=11 // pred_fallthru
          _
        // Predicated region
        $region37: #{tpu_custom_call.1} parent=11 // pred_check
          %p284 = pneg %p192
        $region38: #{tpu_custom_call.1} parent=11 // pred_check_branch
          %286 = sbr.rel (%p284) target = $region40
        $region39: #{tpu_custom_call.1} parent=11 // pred_region
          _
        $region40: #{tpu_custom_call.1} parent=11 // pred_fallthru
          _
      $region12: #{tpu_custom_call.1} parent=5 // pred_fallthru
        _
      %p287 = scmp.lt.s32.totalorder %s19, 2
      // Predicated region
      $region41: #{tpu_custom_call.1} parent=5 // pred_check
        %p288 = pneg %p287
      $region42: #{tpu_custom_call.1} parent=5 // pred_check_branch
        %290 = sbr.rel (%p288) target = $region44
      $region43: #{tpu_custom_call.1} parent=5 // pred_region
        // Predicated region
        $region45: #{tpu_custom_call.1} parent=43 // pred_check
          %p291 = pneg %p39
        $region46: #{tpu_custom_call.1} parent=43 // pred_check_branch
          %293 = sbr.rel (%p291) target = $region48
        $region47: #{tpu_custom_call.1} parent=43 // pred_region
          %p294 = scmp.lt.s32.totalorder %s19, 1
          %s295 = scalar_select %p294, %s19, 1
          %s296 = smul.addr %s295, 2
          %s297 = smul.addr %s296, 8
          %s298 = scalar_lea.vmem %s0, %s297
        $region48: #{tpu_custom_call.1} parent=43 // pred_fallthru
          _
      $region44: #{tpu_custom_call.1} parent=5 // pred_fallthru
        _
      %p299 = scmp.le.s32.totalorder 1, %s19
      %p300 = scmp.lt.s32.totalorder %s19, 3
      %p301 = pnand %p299, %p300
      %p302 = pneg %p301
      // Predicated region
      $region49: #{tpu_custom_call.1} parent=5 // pred_check
        _
      $region50: #{tpu_custom_call.1} parent=5 // pred_check_branch
        %304 = sbr.rel (%p301) target = $region52
      $region51: #{tpu_custom_call.1} parent=5 // pred_region
        %s305 = ssub.s32 %s19, 1
        // Predicated region
        $region53: #{tpu_custom_call.1} parent=51 // pred_check
          %p306 = pneg %p66
        $region54: #{tpu_custom_call.1} parent=51 // pred_check_branch
          %308 = sbr.rel (%p306) target = $region56
        $region55: #{tpu_custom_call.1} parent=51 // pred_region
          %310 = dma.done [#allocation3], 2048
        $region56: #{tpu_custom_call.1} parent=51 // pred_fallthru
          _
        // Predicated region
        $region57: #{tpu_custom_call.1} parent=51 // pred_check
          %p311 = pneg %p87
        $region58: #{tpu_custom_call.1} parent=51 // pred_check_branch
          %313 = sbr.rel (%p311) target = $region60
        $region59: #{tpu_custom_call.1} parent=51 // pred_region
          %315 = dma.done [#allocation6], 2048
        $region60: #{tpu_custom_call.1} parent=51 // pred_fallthru
          _
        // Predicated region
        $region61: #{tpu_custom_call.1} parent=51 // pred_check
          %p316 = pneg %p150
        $region62: #{tpu_custom_call.1} parent=51 // pred_check_branch
          %318 = sbr.rel (%p316) target = $region64
        $region63: #{tpu_custom_call.1} parent=51 // pred_region
          %320 = dma.done [#allocation6], 2048
        $region64: #{tpu_custom_call.1} parent=51 // pred_fallthru
          _
        %p321 = scmp.lt.s32.totalorder %s24, 1
        %s322 = scalar_select %p321, %s24, 1
        %s323 = smul.addr %s322, 2
        %s324 = smul.addr %s323, 8
        %s325 = scalar_lea.vmem %s0, %s324
        %p326 = pneg %p45
        %p327 = pneg %p42
        %p328 = pneg %p66
        %p329 = pneg %p63
        %p330 = pneg %p87
        %p331 = pneg %p84
        %p332 = pneg %p108
        %p333 = pneg %p105
        %p334 = pneg %p129
        %p335 = pneg %p126
        %p336 = pneg %p150
        %p337 = pneg %p147
        %p338 = pneg %p171
        %p339 = pneg %p168
        %p340 = pneg %p192
        %p341 = pneg %p189
        %p342 = pneg %p218
        %p343 = pneg %p215
        %s344 = sand.u32 %s205, 1
        %s345 = scalar_lea.sflag [#allocation4], %s344
        %s346 = sand.u32 %s205, 1
        %s347 = smul.addr %s346, 16
        %s348 = scalar_lea.vmem [#allocation8], %s347
        %p349 = scmp.lt.s32.totalorder %s24, 1
        %s350 = scalar_select %p349, %s24, 1
        %s351 = smul.addr %s350, 2
        %s352 = smul.addr %s351, 8
        %s353 = scalar_lea.vmem %s0, %s352
        %v354 = vld [vmem:[%s353] sm:$0xff]
        %v355 = vld [vmem:[%s353 + $0x8] sm:$0xff]
        %v356 = vld [vmem:[#allocation2] sm:$0xff]
        %v357 = vld [vmem:[#allocation2 + $0x8] sm:$0xff]
        %v358 = vld [vmem:[#allocation2 + $0x10] sm:$0xff]
        %v359 = vld [vmem:[#allocation2 + $0x18] sm:$0xff]
        %v360 = vld [vmem:[#allocation2 + $0x20] sm:$0xff]
        %v361 = vld [vmem:[#allocation2 + $0x28] sm:$0xff]
        %v362 = vld [vmem:[#allocation2 + $0x30] sm:$0xff]
        %v363 = vld [vmem:[#allocation2 + $0x38] sm:$0xff]
        %v364 = vld [vmem:[#allocation2 + $0x40] sm:$0xff]
        %v365 = vld [vmem:[#allocation2 + $0x48] sm:$0xff]
        %v366 = vld [vmem:[#allocation2 + $0x50] sm:$0xff]
        %v367 = vld [vmem:[#allocation2 + $0x58] sm:$0xff]
        %v368 = vld [vmem:[#allocation2 + $0x60] sm:$0xff]
        %v369 = vld [vmem:[#allocation2 + $0x68] sm:$0xff]
        %v370 = vld [vmem:[#allocation2 + $0x70] sm:$0xff]
        %v371 = vld [vmem:[#allocation2 + $0x78] sm:$0xff]
        %372 = vmatpush.msra.mxu0 %v371
        %373 = vmatpush.msra.mxu0 %v370
        %374 = vmatpush.msra.mxu0 %v369
        %375 = vmatpush.msra.mxu0 %v368
        %376 = vmatpush.msra.mxu0 %v367
        %377 = vmatpush.msra.mxu0 %v366
        %378 = vmatpush.msra.mxu0 %v365
        %379 = vmatpush.msra.mxu0 %v364
        %380 = vmatpush.msra.mxu0 %v363
        %381 = vmatpush.msra.mxu0 %v362
        %382 = vmatpush.msra.mxu0 %v361
        %383 = vmatpush.msra.mxu0 %v360
        %384 = vmatpush.msra.mxu0 %v359
        %385 = vmatpush.msra.mxu0 %v358
        %386 = vmatpush.msra.mxu0 %v357
        %387 = vmatpush.msra.mxu0 %v356
        %388 = vmatmul.f32.gmra.mxu0 %v354
        %v389 = vpop.f32.mrf.mxu0
        %v390 = vadd.f32 0.0, %v389
        %391 = vmatmul.f32.gmra.mxu0 %v355
        %v392 = vpop.f32.mrf.mxu0
        %v393 = vadd.f32 0.0, %v392
        %394 = vdwg.mxu0
        %v395 = vld [vmem:[#allocation5] sm:$0xff]
        %v396 = vld [vmem:[#allocation5 + $0x8] sm:$0xff]
        %v397 = vld [vmem:[#allocation5 + $0x10] sm:$0xff]
        %v398 = vld [vmem:[#allocation5 + $0x18] sm:$0xff]
        %v399 = vld [vmem:[#allocation5 + $0x20] sm:$0xff]
        %v400 = vld [vmem:[#allocation5 + $0x28] sm:$0xff]
        %v401 = vld [vmem:[#allocation5 + $0x30] sm:$0xff]
        %v402 = vld [vmem:[#allocation5 + $0x38] sm:$0xff]
        %v403 = vld [vmem:[#allocation5 + $0x40] sm:$0xff]
        %v404 = vld [vmem:[#allocation5 + $0x48] sm:$0xff]
        %v405 = vld [vmem:[#allocation5 + $0x50] sm:$0xff]
        %v406 = vld [vmem:[#allocation5 + $0x58] sm:$0xff]
        %v407 = vld [vmem:[#allocation5 + $0x60] sm:$0xff]
        %v408 = vld [vmem:[#allocation5 + $0x68] sm:$0xff]
        %v409 = vld [vmem:[#allocation5 + $0x70] sm:$0xff]
        %v410 = vld [vmem:[#allocation5 + $0x78] sm:$0xff]
        %411 = vmatpush.msra.mxu0 %v410
        %412 = vmatpush.msra.mxu0 %v409
        %413 = vmatpush.msra.mxu0 %v408
        %414 = vmatpush.msra.mxu0 %v407
        %415 = vmatpush.msra.mxu0 %v406
        %416 = vmatpush.msra.mxu0 %v405
        %417 = vmatpush.msra.mxu0 %v404
        %418 = vmatpush.msra.mxu0 %v403
        %419 = vmatpush.msra.mxu0 %v402
        %420 = vmatpush.msra.mxu0 %v401
        %421 = vmatpush.msra.mxu0 %v400
        %422 = vmatpush.msra.mxu0 %v399
        %423 = vmatpush.msra.mxu0 %v398
        %424 = vmatpush.msra.mxu0 %v397
        %425 = vmatpush.msra.mxu0 %v396
        %426 = vmatpush.msra.mxu0 %v395
        %427 = vmatmul.f32.gmra.mxu0 %v354
        %v428 = vpop.f32.mrf.mxu0
        %v429 = vadd.f32 0.0, %v428
        %430 = vmatmul.f32.gmra.mxu0 %v355
        %v431 = vpop.f32.mrf.mxu0
        %v432 = vadd.f32 0.0, %v431
        %433 = vdwg.mxu0
        %vm434 = vcmp.gt.f32.partialorder %v390, 0.0
        %vm435 = vcmp.gt.f32.partialorder %v393, 0.0
        %v436 = vmul.f32 %v390, 0.01
        %v437 = vmul.f32 %v393, 0.01
        %v438 = vsel %vm434, %v390, %v436
        %v439 = vsel %vm435, %v393, %v437
        %vm440 = vcmp.gt.f32.partialorder %v429, 0.0
        %vm441 = vcmp.gt.f32.partialorder %v432, 0.0
        %v442 = vmul.f32 %v429, 0.01
        %v443 = vmul.f32 %v432, 0.01
        %v444 = vsel %vm440, %v429, %v442
        %v445 = vsel %vm441, %v432, %v443
        %v446 = vld [vmem:[%s3] sm:$0xff]
        %v447 = vld [vmem:[%s3 + $0x8] sm:$0xff]
        %v448 = vld [vmem:[%s3 + $0x10] sm:$0xff]
        %v449 = vld [vmem:[%s3 + $0x18] sm:$0xff]
        %vm450 = vcmask 261120
        %v452 = vsel %vm450, %v438, 0
        %v455 = vsel %vm450, %v439, 0
        %457 = vmatpush.msra.mxu0 0.0
        %458 = vmatpush.msra.mxu0 0.0
        %459 = vmatpush.msra.mxu0 0.0
        %460 = vmatpush.msra.mxu0 0.0
        %461 = vmatpush.msra.mxu0 0.0
        %462 = vmatpush.msra.mxu0 0.0
        %463 = vmatpush.msra.mxu0 0.0
        %464 = vmatpush.msra.mxu0 0.0
        %465 = vmatpush.msra.mxu0 0.0
        %466 = vmatpush.msra.mxu0 0.0
        %467 = vmatpush.msra.mxu0 0.0
        %468 = vmatpush.msra.mxu0 0.0
        %469 = vmatpush.msra.mxu0 %v449
        %470 = vmatpush.msra.mxu0 %v448
        %471 = vmatpush.msra.mxu0 %v447
        %472 = vmatpush.msra.mxu0 %v446
        %473 = vmatmul.f32.gmra.mxu0 %v452
        %v474 = vpop.f32.mrf.mxu0
        %v475 = vadd.f32 0.0, %v474
        %476 = vmatmul.f32.gmra.mxu0 %v455
        %v477 = vpop.f32.mrf.mxu0
        %v478 = vadd.f32 0.0, %v477
        %479 = vdwg.mxu0
        %v480 = vld [vmem:[%s4] sm:$0x1]
        %v482 = vsel %vm450, %v480, 0
        %v485 = vsel %vm450, %v444, 0
        %v488 = vsel %vm450, %v445, 0
        %490 = vmatpush.xpose.msra.mxu0 0.0
        %491 = vmatpush.xpose.msra.mxu0 0.0
        %492 = vmatpush.xpose.msra.mxu0 0.0
        %493 = vmatpush.xpose.msra.mxu0 0.0
        %494 = vmatpush.xpose.msra.mxu0 0.0
        %495 = vmatpush.xpose.msra.mxu0 0.0
        %496 = vmatpush.xpose.msra.mxu0 0.0
        %497 = vmatpush.xpose.msra.mxu0 0.0
        %498 = vmatpush.xpose.msra.mxu0 0.0
        %499 = vmatpush.xpose.msra.mxu0 0.0
        %500 = vmatpush.xpose.msra.mxu0 0.0
        %501 = vmatpush.xpose.msra.mxu0 0.0
        %502 = vmatpush.xpose.msra.mxu0 0.0
        %503 = vmatpush.xpose.msra.mxu0 0.0
        %504 = vmatpush.xpose.msra.mxu0 %v488
        %505 = vmatpush.xpose.msra.mxu0 %v485
        %506 = vmatmul.f32.gmra.mxu0 %v482
        %v507 = vpop.f32.mrf.mxu0
        %v508 = vadd.f32 0.0, %v507
        %509 = vdwg.mxu0
        %511 = vset.pattern.permute.xlu0 0
        %512 = vperm.xlu0 %511, %v475
        %v513 = vpop.permute.xlu0 %512
        %516 = vset.pattern.permute.xlu0 0
        %517 = vperm.xlu0 %516, %v478
        %v518 = vpop.permute.xlu0 %517
        %v520 = vperm.slane %v508, 0
        %v521 = vadd.f32 %v513, %v520
        %v522 = vadd.f32 %v518, %v520
        %vm523 = vcmask 130048
        %v524 = vsel %vm523, %v521, -inf
        %525 = vmax.xlane.f32.xlu0 %v524
        %v526 = vpop.xlane.xlu0 %525
        %v527 = vsel %vm523, %v522, -inf
        %528 = vmax.xlane.f32.xlu0 %v527
        %v529 = vpop.xlane.xlu0 %528
        %v530 = vsub.f32 %v521, %v526
        %v531 = vsub.f32 %v522, %v529
        %v532 = vmul.f32 %v530, 1.442695
        %v533 = vpow.pop %v532
        %v534 = vmul.f32 %v531, 1.442695
        %v535 = vpow.pop %v534
        %v536 = vsel %vm523, %v533, 0.0
        %537 = vadd.xlane.f32.xlu0 %v536
        %v538 = vpop.xlane.xlu0 %537
        %v539 = vsel %vm523, %v535, 0.0
        %540 = vadd.xlane.f32.xlu0 %v539
        %v541 = vpop.xlane.xlu0 %540
        %v542 = vrcp.pop %v538
        %v543 = vrcp.pop %v541
        %v544 = vmul.f32 %v533, %v542
        %v545 = vmul.f32 %v535, %v543
        %v547 = vsel %vm523, %v544, 0
        %v550 = vsel %vm523, %v545, 0
        %552 = vmatpush.msra.mxu0 0.0
        %553 = vmatpush.msra.mxu0 0.0
        %554 = vmatpush.msra.mxu0 0.0
        %555 = vmatpush.msra.mxu0 0.0
        %556 = vmatpush.msra.mxu0 0.0
        %557 = vmatpush.msra.mxu0 0.0
        %558 = vmatpush.msra.mxu0 0.0
        %559 = vmatpush.msra.mxu0 0.0
        %560 = vmatpush.msra.mxu0 0.0
        %561 = vmatpush.msra.mxu0 0.0
        %562 = vmatpush.msra.mxu0 0.0
        %563 = vmatpush.msra.mxu0 0.0
        %564 = vmatpush.msra.mxu0 0.0
        %565 = vmatpush.msra.mxu0 0.0
        %566 = vmatpush.msra.mxu0 %v432
        %567 = vmatpush.msra.mxu0 %v429
        %568 = vmatmul.f32.gmra.mxu0 %v547
        %v569 = vpop.f32.mrf.mxu0
        %v570 = vadd.f32 0.0, %v569
        %571 = vmatmul.f32.gmra.mxu0 %v550
        %v572 = vpop.f32.mrf.mxu0
        %v573 = vadd.f32 0.0, %v572
        %574 = vdwg.mxu0
        %v575 = vld [vmem:[#allocation7] sm:$0xff]
        %v576 = vld [vmem:[#allocation7 + $0x8] sm:$0xff]
        %v577 = vld [vmem:[#allocation7 + $0x10] sm:$0xff]
        %v578 = vld [vmem:[#allocation7 + $0x18] sm:$0xff]
        %579 = vrot.lane.b32.xlu0 %v438, 96
        %v580 = vpop.permute.xlu0 %579
        %581 = vrot.lane.b32.xlu0 %v439, 96
        %v582 = vpop.permute.xlu0 %581
        %v583 = vsel %vm450, %v580, 0
        %v585 = vsel %vm450, %v582, 0
        %587 = vmatpush.msra.mxu0 0.0
        %588 = vmatpush.msra.mxu0 0.0
        %589 = vmatpush.msra.mxu0 0.0
        %590 = vmatpush.msra.mxu0 0.0
        %591 = vmatpush.msra.mxu0 0.0
        %592 = vmatpush.msra.mxu0 0.0
        %593 = vmatpush.msra.mxu0 0.0
        %594 = vmatpush.msra.mxu0 0.0
        %595 = vmatpush.msra.mxu0 0.0
        %596 = vmatpush.msra.mxu0 0.0
        %597 = vmatpush.msra.mxu0 0.0
        %598 = vmatpush.msra.mxu0 0.0
        %599 = vmatpush.msra.mxu0 %v449
        %600 = vmatpush.msra.mxu0 %v448
        %601 = vmatpush.msra.mxu0 %v447
        %602 = vmatpush.msra.mxu0 %v446
        %603 = vmatmul.f32.gmra.mxu0 %v583
        %v604 = vpop.f32.mrf.mxu0
        %v605 = vadd.f32 0.0, %v604
        %606 = vmatmul.f32.gmra.mxu0 %v585
        %v607 = vpop.f32.mrf.mxu0
        %v608 = vadd.f32 0.0, %v607
        %609 = vdwg.mxu0
        %610 = vrot.lane.b32.xlu0 %v444, 96
        %v611 = vpop.permute.xlu0 %610
        %612 = vrot.lane.b32.xlu0 %v445, 96
        %v613 = vpop.permute.xlu0 %612
        %v614 = vsel %vm450, %v611, 0
        %v616 = vsel %vm450, %v613, 0
        %618 = vmatpush.xpose.msra.mxu0 0.0
        %619 = vmatpush.xpose.msra.mxu0 0.0
        %620 = vmatpush.xpose.msra.mxu0 0.0
        %621 = vmatpush.xpose.msra.mxu0 0.0
        %622 = vmatpush.xpose.msra.mxu0 0.0
        %623 = vmatpush.xpose.msra.mxu0 0.0
        %624 = vmatpush.xpose.msra.mxu0 0.0
        %625 = vmatpush.xpose.msra.mxu0 0.0
        %626 = vmatpush.xpose.msra.mxu0 0.0
        %627 = vmatpush.xpose.msra.mxu0 0.0
        %628 = vmatpush.xpose.msra.mxu0 0.0
        %629 = vmatpush.xpose.msra.mxu0 0.0
        %630 = vmatpush.xpose.msra.mxu0 0.0
        %631 = vmatpush.xpose.msra.mxu0 0.0
        %632 = vmatpush.xpose.msra.mxu0 %v616
        %633 = vmatpush.xpose.msra.mxu0 %v614
        %634 = vmatmul.f32.gmra.mxu0 %v482
        %v635 = vpop.f32.mrf.mxu0
        %v636 = vadd.f32 0.0, %v635
        %637 = vdwg.mxu0
        %639 = vset.pattern.permute.xlu0 0
        %640 = vperm.xlu0 %639, %v605
        %v641 = vpop.permute.xlu0 %640
        %644 = vset.pattern.permute.xlu0 0
        %645 = vperm.xlu0 %644, %v608
        %v646 = vpop.permute.xlu0 %645
        %v648 = vperm.slane %v636, 0
        %v649 = vadd.f32 %v641, %v648
        %v650 = vadd.f32 %v646, %v648
        %v651 = vsel %vm523, %v649, -inf
        %652 = vmax.xlane.f32.xlu0 %v651
        %v653 = vpop.xlane.xlu0 %652
        %v654 = vsel %vm523, %v650, -inf
        %655 = vmax.xlane.f32.xlu0 %v654
        %v656 = vpop.xlane.xlu0 %655
        %v657 = vsub.f32 %v649, %v653
        %v658 = vsub.f32 %v650, %v656
        %v659 = vmul.f32 %v657, 1.442695
        %v660 = vpow.pop %v659
        %v661 = vmul.f32 %v658, 1.442695
        %v662 = vpow.pop %v661
        %v663 = vsel %vm523, %v660, 0.0
        %664 = vadd.xlane.f32.xlu0 %v663
        %v665 = vpop.xlane.xlu0 %664
        %v666 = vsel %vm523, %v662, 0.0
        %667 = vadd.xlane.f32.xlu0 %v666
        %v668 = vpop.xlane.xlu0 %667
        %v669 = vrcp.pop %v665
        %v670 = vrcp.pop %v668
        %v671 = vmul.f32 %v660, %v669
        %v672 = vmul.f32 %v662, %v670
        %675 = vrot.lane.b32.xlu0 %v429, 96
        %v676 = vpop.permute.xlu0 %675
        %677 = vrot.lane.b32.xlu0 %v432, 96
        %v678 = vpop.permute.xlu0 %677
        %v682 = vsel %vm523, %v671, 0
        %v685 = vsel %vm523, %v672, 0
        %687 = vmatpush.msra.mxu0 0.0
        %688 = vmatpush.msra.mxu0 0.0
        %689 = vmatpush.msra.mxu0 0.0
        %690 = vmatpush.msra.mxu0 0.0
        %691 = vmatpush.msra.mxu0 0.0
        %692 = vmatpush.msra.mxu0 0.0
        %693 = vmatpush.msra.mxu0 0.0
        %694 = vmatpush.msra.mxu0 0.0
        %695 = vmatpush.msra.mxu0 0.0
        %696 = vmatpush.msra.mxu0 0.0
        %697 = vmatpush.msra.mxu0 0.0
        %698 = vmatpush.msra.mxu0 0.0
        %699 = vmatpush.msra.mxu0 0.0
        %700 = vmatpush.msra.mxu0 0.0
        %701 = vmatpush.msra.mxu0 %v678
        %702 = vmatpush.msra.mxu0 %v676
        %703 = vmatmul.f32.gmra.mxu0 %v682
        %v704 = vpop.f32.mrf.mxu0
        %v705 = vadd.f32 0.0, %v704
        %706 = vmatmul.f32.gmra.mxu0 %v685
        %v707 = vpop.f32.mrf.mxu0
        %v708 = vadd.f32 0.0, %v707
        %709 = vdwg.mxu0
        %v710 = vld [vmem:[#allocation7 + $0x20] sm:$0xff]
        %v711 = vld [vmem:[#allocation7 + $0x28] sm:$0xff]
        %v712 = vld [vmem:[#allocation7 + $0x30] sm:$0xff]
        %v713 = vld [vmem:[#allocation7 + $0x38] sm:$0xff]
        %v715 = vsel %vm450, %v705, 0
        %v718 = vsel %vm450, %v708, 0
        %720 = vmatpush.msra.mxu0 0.0
        %721 = vmatpush.msra.mxu0 0.0
        %722 = vmatpush.msra.mxu0 0.0
        %723 = vmatpush.msra.mxu0 0.0
        %724 = vmatpush.msra.mxu0 0.0
        %725 = vmatpush.msra.mxu0 0.0
        %726 = vmatpush.msra.mxu0 0.0
        %727 = vmatpush.msra.mxu0 0.0
        %728 = vmatpush.msra.mxu0 0.0
        %729 = vmatpush.msra.mxu0 0.0
        %730 = vmatpush.msra.mxu0 0.0
        %731 = vmatpush.msra.mxu0 0.0
        %732 = vmatpush.msra.mxu0 %v713
        %733 = vmatpush.msra.mxu0 %v712
        %734 = vmatpush.msra.mxu0 %v711
        %735 = vmatpush.msra.mxu0 %v710
        %736 = vmatmul.f32.gmra.mxu0 %v715
        %v737 = vpop.f32.mrf.mxu0
        %v738 = vadd.f32 0.0, %v737
        %739 = vmatmul.f32.gmra.mxu0 %v718
        %v740 = vpop.f32.mrf.mxu0
        %v741 = vadd.f32 0.0, %v740
        %742 = vdwg.mxu0
        %v744 = vsel %vm450, %v570, 0
        %v747 = vsel %vm450, %v573, 0
        %749 = vmatpush.msra.mxu0 0.0
        %750 = vmatpush.msra.mxu0 0.0
        %751 = vmatpush.msra.mxu0 0.0
        %752 = vmatpush.msra.mxu0 0.0
        %753 = vmatpush.msra.mxu0 0.0
        %754 = vmatpush.msra.mxu0 0.0
        %755 = vmatpush.msra.mxu0 0.0
        %756 = vmatpush.msra.mxu0 0.0
        %757 = vmatpush.msra.mxu0 0.0
        %758 = vmatpush.msra.mxu0 0.0
        %759 = vmatpush.msra.mxu0 0.0
        %760 = vmatpush.msra.mxu0 0.0
        %761 = vmatpush.msra.mxu0 %v578
        %762 = vmatpush.msra.mxu0 %v577
        %763 = vmatpush.msra.mxu0 %v576
        %764 = vmatpush.msra.mxu0 %v575
        %765 = vmatmul.f32.gmra.mxu0 %v744
        %v766 = vpop.f32.mrf.mxu0
        %v767 = vadd.f32 %v738, %v766
        %768 = vmatmul.f32.gmra.mxu0 %v747
        %v769 = vpop.f32.mrf.mxu0
        %v770 = vadd.f32 %v741, %v769
        %771 = vdwg.mxu0
        %772 = vrot.lane.b32.xlu0 %v438, 64
        %v773 = vpop.permute.xlu0 %772
        %774 = vrot.lane.b32.xlu0 %v439, 64
        %v775 = vpop.permute.xlu0 %774
        %v776 = vsel %vm450, %v773, 0
        %v778 = vsel %vm450, %v775, 0
        %780 = vmatpush.msra.mxu0 0.0
        %781 = vmatpush.msra.mxu0 0.0
        %782 = vmatpush.msra.mxu0 0.0
        %783 = vmatpush.msra.mxu0 0.0
        %784 = vmatpush.msra.mxu0 0.0
        %785 = vmatpush.msra.mxu0 0.0
        %786 = vmatpush.msra.mxu0 0.0
        %787 = vmatpush.msra.mxu0 0.0
        %788 = vmatpush.msra.mxu0 0.0
        %789 = vmatpush.msra.mxu0 0.0
        %790 = vmatpush.msra.mxu0 0.0
        %791 = vmatpush.msra.mxu0 0.0
        %792 = vmatpush.msra.mxu0 %v449
        %793 = vmatpush.msra.mxu0 %v448
        %794 = vmatpush.msra.mxu0 %v447
        %795 = vmatpush.msra.mxu0 %v446
        %796 = vmatmul.f32.gmra.mxu0 %v776
        %v797 = vpop.f32.mrf.mxu0
        %v798 = vadd.f32 0.0, %v797
        %799 = vmatmul.f32.gmra.mxu0 %v778
        %v800 = vpop.f32.mrf.mxu0
        %v801 = vadd.f32 0.0, %v800
        %802 = vdwg.mxu0
        %803 = vrot.lane.b32.xlu0 %v444, 64
        %v804 = vpop.permute.xlu0 %803
        %805 = vrot.lane.b32.xlu0 %v445, 64
        %v806 = vpop.permute.xlu0 %805
        %v807 = vsel %vm450, %v804, 0
        %v809 = vsel %vm450, %v806, 0
        %811 = vmatpush.xpose.msra.mxu0 0.0
        %812 = vmatpush.xpose.msra.mxu0 0.0
        %813 = vmatpush.xpose.msra.mxu0 0.0
        %814 = vmatpush.xpose.msra.mxu0 0.0
        %815 = vmatpush.xpose.msra.mxu0 0.0
        %816 = vmatpush.xpose.msra.mxu0 0.0
        %817 = vmatpush.xpose.msra.mxu0 0.0
        %818 = vmatpush.xpose.msra.mxu0 0.0
        %819 = vmatpush.xpose.msra.mxu0 0.0
        %820 = vmatpush.xpose.msra.mxu0 0.0
        %821 = vmatpush.xpose.msra.mxu0 0.0
        %822 = vmatpush.xpose.msra.mxu0 0.0
        %823 = vmatpush.xpose.msra.mxu0 0.0
        %824 = vmatpush.xpose.msra.mxu0 0.0
        %825 = vmatpush.xpose.msra.mxu0 %v809
        %826 = vmatpush.xpose.msra.mxu0 %v807
        %827 = vmatmul.f32.gmra.mxu0 %v482
        %v828 = vpop.f32.mrf.mxu0
        %v829 = vadd.f32 0.0, %v828
        %830 = vdwg.mxu0
        %832 = vset.pattern.permute.xlu0 0
        %833 = vperm.xlu0 %832, %v798
        %v834 = vpop.permute.xlu0 %833
        %837 = vset.pattern.permute.xlu0 0
        %838 = vperm.xlu0 %837, %v801
        %v839 = vpop.permute.xlu0 %838
        %v841 = vperm.slane %v829, 0
        %v842 = vadd.f32 %v834, %v841
        %v843 = vadd.f32 %v839, %v841
        %v844 = vsel %vm523, %v842, -inf
        %845 = vmax.xlane.f32.xlu0 %v844
        %v846 = vpop.xlane.xlu0 %845
        %v847 = vsel %vm523, %v843, -inf
        %848 = vmax.xlane.f32.xlu0 %v847
        %v849 = vpop.xlane.xlu0 %848
        %v850 = vsub.f32 %v842, %v846
        %v851 = vsub.f32 %v843, %v849
        %v852 = vmul.f32 %v850, 1.442695
        %v853 = vpow.pop %v852
        %v854 = vmul.f32 %v851, 1.442695
        %v855 = vpow.pop %v854
        %v856 = vsel %vm523, %v853, 0.0
        %857 = vadd.xlane.f32.xlu0 %v856
        %v858 = vpop.xlane.xlu0 %857
        %v859 = vsel %vm523, %v855, 0.0
        %860 = vadd.xlane.f32.xlu0 %v859
        %v861 = vpop.xlane.xlu0 %860
        %v862 = vrcp.pop %v858
        %v863 = vrcp.pop %v861
        %v864 = vmul.f32 %v853, %v862
        %v865 = vmul.f32 %v855, %v863
        %866 = vrot.lane.b32.xlu0 %v429, 64
        %v867 = vpop.permute.xlu0 %866
        %868 = vrot.lane.b32.xlu0 %v432, 64
        %v869 = vpop.permute.xlu0 %868
        %v873 = vsel %vm523, %v864, 0
        %v876 = vsel %vm523, %v865, 0
        %878 = vmatpush.msra.mxu0 0.0
        %879 = vmatpush.msra.mxu0 0.0
        %880 = vmatpush.msra.mxu0 0.0
        %881 = vmatpush.msra.mxu0 0.0
        %882 = vmatpush.msra.mxu0 0.0
        %883 = vmatpush.msra.mxu0 0.0
        %884 = vmatpush.msra.mxu0 0.0
        %885 = vmatpush.msra.mxu0 0.0
        %886 = vmatpush.msra.mxu0 0.0
        %887 = vmatpush.msra.mxu0 0.0
        %888 = vmatpush.msra.mxu0 0.0
        %889 = vmatpush.msra.mxu0 0.0
        %890 = vmatpush.msra.mxu0 0.0
        %891 = vmatpush.msra.mxu0 0.0
        %892 = vmatpush.msra.mxu0 %v869
        %893 = vmatpush.msra.mxu0 %v867
        %894 = vmatmul.f32.gmra.mxu0 %v873
        %v895 = vpop.f32.mrf.mxu0
        %v896 = vadd.f32 0.0, %v895
        %897 = vmatmul.f32.gmra.mxu0 %v876
        %v898 = vpop.f32.mrf.mxu0
        %v899 = vadd.f32 0.0, %v898
        %900 = vdwg.mxu0
        %v901 = vld [vmem:[#allocation7 + $0x40] sm:$0xff]
        %v902 = vld [vmem:[#allocation7 + $0x48] sm:$0xff]
        %v903 = vld [vmem:[#allocation7 + $0x50] sm:$0xff]
        %v904 = vld [vmem:[#allocation7 + $0x58] sm:$0xff]
        %v906 = vsel %vm450, %v896, 0
        %v909 = vsel %vm450, %v899, 0
        %911 = vmatpush.msra.mxu0 0.0
        %912 = vmatpush.msra.mxu0 0.0
        %913 = vmatpush.msra.mxu0 0.0
        %914 = vmatpush.msra.mxu0 0.0
        %915 = vmatpush.msra.mxu0 0.0
        %916 = vmatpush.msra.mxu0 0.0
        %917 = vmatpush.msra.mxu0 0.0
        %918 = vmatpush.msra.mxu0 0.0
        %919 = vmatpush.msra.mxu0 0.0
        %920 = vmatpush.msra.mxu0 0.0
        %921 = vmatpush.msra.mxu0 0.0
        %922 = vmatpush.msra.mxu0 0.0
        %923 = vmatpush.msra.mxu0 %v904
        %924 = vmatpush.msra.mxu0 %v903
        %925 = vmatpush.msra.mxu0 %v902
        %926 = vmatpush.msra.mxu0 %v901
        %927 = vmatmul.f32.gmra.mxu0 %v906
        %v928 = vpop.f32.mrf.mxu0
        %v929 = vadd.f32 0.0, %v928
        %930 = vmatmul.f32.gmra.mxu0 %v909
        %v931 = vpop.f32.mrf.mxu0
        %v932 = vadd.f32 0.0, %v931
        %933 = vdwg.mxu0
        %v934 = vadd.f32 %v767, %v929
        %v935 = vadd.f32 %v770, %v932
        %936 = vrot.lane.b32.xlu0 %v438, 32
        %v937 = vpop.permute.xlu0 %936
        %938 = vrot.lane.b32.xlu0 %v439, 32
        %v939 = vpop.permute.xlu0 %938
        %v940 = vsel %vm450, %v937, 0
        %v942 = vsel %vm450, %v939, 0
        %944 = vmatpush.msra.mxu0 0.0
        %945 = vmatpush.msra.mxu0 0.0
        %946 = vmatpush.msra.mxu0 0.0
        %947 = vmatpush.msra.mxu0 0.0
        %948 = vmatpush.msra.mxu0 0.0
        %949 = vmatpush.msra.mxu0 0.0
        %950 = vmatpush.msra.mxu0 0.0
        %951 = vmatpush.msra.mxu0 0.0
        %952 = vmatpush.msra.mxu0 0.0
        %953 = vmatpush.msra.mxu0 0.0
        %954 = vmatpush.msra.mxu0 0.0
        %955 = vmatpush.msra.mxu0 0.0
        %956 = vmatpush.msra.mxu0 %v449
        %957 = vmatpush.msra.mxu0 %v448
        %958 = vmatpush.msra.mxu0 %v447
        %959 = vmatpush.msra.mxu0 %v446
        %960 = vmatmul.f32.gmra.mxu0 %v940
        %v961 = vpop.f32.mrf.mxu0
        %v962 = vadd.f32 0.0, %v961
        %963 = vmatmul.f32.gmra.mxu0 %v942
        %v964 = vpop.f32.mrf.mxu0
        %v965 = vadd.f32 0.0, %v964
        %966 = vdwg.mxu0
        %967 = vrot.lane.b32.xlu0 %v444, 32
        %v968 = vpop.permute.xlu0 %967
        %969 = vrot.lane.b32.xlu0 %v445, 32
        %v970 = vpop.permute.xlu0 %969
        %v971 = vsel %vm450, %v968, 0
        %v973 = vsel %vm450, %v970, 0
        %975 = vmatpush.xpose.msra.mxu0 0.0
        %976 = vmatpush.xpose.msra.mxu0 0.0
        %977 = vmatpush.xpose.msra.mxu0 0.0
        %978 = vmatpush.xpose.msra.mxu0 0.0
        %979 = vmatpush.xpose.msra.mxu0 0.0
        %980 = vmatpush.xpose.msra.mxu0 0.0
        %981 = vmatpush.xpose.msra.mxu0 0.0
        %982 = vmatpush.xpose.msra.mxu0 0.0
        %983 = vmatpush.xpose.msra.mxu0 0.0
        %984 = vmatpush.xpose.msra.mxu0 0.0
        %985 = vmatpush.xpose.msra.mxu0 0.0
        %986 = vmatpush.xpose.msra.mxu0 0.0
        %987 = vmatpush.xpose.msra.mxu0 0.0
        %988 = vmatpush.xpose.msra.mxu0 0.0
        %989 = vmatpush.xpose.msra.mxu0 %v973
        %990 = vmatpush.xpose.msra.mxu0 %v971
        %991 = vmatmul.f32.gmra.mxu0 %v482
        %v992 = vpop.f32.mrf.mxu0
        %v993 = vadd.f32 0.0, %v992
        %994 = vdwg.mxu0
        %996 = vset.pattern.permute.xlu0 0
        %997 = vperm.xlu0 %996, %v962
        %v998 = vpop.permute.xlu0 %997
        %1001 = vset.pattern.permute.xlu0 0
        %1002 = vperm.xlu0 %1001, %v965
        %v1003 = vpop.permute.xlu0 %1002
        %v1005 = vperm.slane %v993, 0
        %v1006 = vadd.f32 %v998, %v1005
        %v1007 = vadd.f32 %v1003, %v1005
        %v1008 = vsel %vm523, %v1006, -inf
        %1009 = vmax.xlane.f32.xlu0 %v1008
        %v1010 = vpop.xlane.xlu0 %1009
        %v1011 = vsel %vm523, %v1007, -inf
        %1012 = vmax.xlane.f32.xlu0 %v1011
        %v1013 = vpop.xlane.xlu0 %1012
        %v1014 = vsub.f32 %v1006, %v1010
        %v1015 = vsub.f32 %v1007, %v1013
        %v1016 = vmul.f32 %v1014, 1.442695
        %v1017 = vpow.pop %v1016
        %v1018 = vmul.f32 %v1015, 1.442695
        %v1019 = vpow.pop %v1018
        %v1020 = vsel %vm523, %v1017, 0.0
        %1021 = vadd.xlane.f32.xlu0 %v1020
        %v1022 = vpop.xlane.xlu0 %1021
        %v1023 = vsel %vm523, %v1019, 0.0
        %1024 = vadd.xlane.f32.xlu0 %v1023
        %v1025 = vpop.xlane.xlu0 %1024
        %v1026 = vrcp.pop %v1022
        %v1027 = vrcp.pop %v1025
        %v1028 = vmul.f32 %v1017, %v1026
        %v1029 = vmul.f32 %v1019, %v1027
        %1030 = vrot.lane.b32.xlu0 %v429, 32
        %v1031 = vpop.permute.xlu0 %1030
        %1032 = vrot.lane.b32.xlu0 %v432, 32
        %v1033 = vpop.permute.xlu0 %1032
        %v1037 = vsel %vm523, %v1028, 0
        %v1040 = vsel %vm523, %v1029, 0
        %1042 = vmatpush.msra.mxu0 0.0
        %1043 = vmatpush.msra.mxu0 0.0
        %1044 = vmatpush.msra.mxu0 0.0
        %1045 = vmatpush.msra.mxu0 0.0
        %1046 = vmatpush.msra.mxu0 0.0
        %1047 = vmatpush.msra.mxu0 0.0
        %1048 = vmatpush.msra.mxu0 0.0
        %1049 = vmatpush.msra.mxu0 0.0
        %1050 = vmatpush.msra.mxu0 0.0
        %1051 = vmatpush.msra.mxu0 0.0
        %1052 = vmatpush.msra.mxu0 0.0
        %1053 = vmatpush.msra.mxu0 0.0
        %1054 = vmatpush.msra.mxu0 0.0
        %1055 = vmatpush.msra.mxu0 0.0
        %1056 = vmatpush.msra.mxu0 %v1033
        %1057 = vmatpush.msra.mxu0 %v1031
        %1058 = vmatmul.f32.gmra.mxu0 %v1037
        %v1059 = vpop.f32.mrf.mxu0
        %v1060 = vadd.f32 0.0, %v1059
        %1061 = vmatmul.f32.gmra.mxu0 %v1040
        %v1062 = vpop.f32.mrf.mxu0
        %v1063 = vadd.f32 0.0, %v1062
        %1064 = vdwg.mxu0
        %v1065 = vld [vmem:[#allocation7 + $0x60] sm:$0xff]
        %v1066 = vld [vmem:[#allocation7 + $0x68] sm:$0xff]
        %v1067 = vld [vmem:[#allocation7 + $0x70] sm:$0xff]
        %v1068 = vld [vmem:[#allocation7 + $0x78] sm:$0xff]
        %v1070 = vsel %vm450, %v1060, 0
        %v1073 = vsel %vm450, %v1063, 0
        %1075 = vmatpush.msra.mxu0 0.0
        %1076 = vmatpush.msra.mxu0 0.0
        %1077 = vmatpush.msra.mxu0 0.0
        %1078 = vmatpush.msra.mxu0 0.0
        %1079 = vmatpush.msra.mxu0 0.0
        %1080 = vmatpush.msra.mxu0 0.0
        %1081 = vmatpush.msra.mxu0 0.0
        %1082 = vmatpush.msra.mxu0 0.0
        %1083 = vmatpush.msra.mxu0 0.0
        %1084 = vmatpush.msra.mxu0 0.0
        %1085 = vmatpush.msra.mxu0 0.0
        %1086 = vmatpush.msra.mxu0 0.0
        %1087 = vmatpush.msra.mxu0 %v1068
        %1088 = vmatpush.msra.mxu0 %v1067
        %1089 = vmatpush.msra.mxu0 %v1066
        %1090 = vmatpush.msra.mxu0 %v1065
        %1091 = vmatmul.f32.gmra.mxu0 %v1070
        %v1092 = vpop.f32.mrf.mxu0
        %v1093 = vadd.f32 0.0, %v1092
        %1094 = vmatmul.f32.gmra.mxu0 %v1073
        %v1095 = vpop.f32.mrf.mxu0
        %v1096 = vadd.f32 0.0, %v1095
        %1097 = vdwg.mxu0
        %v1098 = vadd.f32 %v934, %v1093
        %v1099 = vadd.f32 %v935, %v1096
        %v1100 = vadd.f32 %v354, %v1098
        %v1101 = vadd.f32 %v355, %v1099
        %1102 = vadd.xlane.f32.xlu0 %v1100
        %v1103 = vpop.xlane.xlu0 %1102
        %1104 = vadd.xlane.f32.xlu0 %v1101
        %v1105 = vpop.xlane.xlu0 %1104
        %v1106 = vrcp.pop 128.0
        %v1107 = vmul.f32 128.0, %v1106
        %v1108 = vsub.f32 1.0, %v1107
        %v1109 = vmul.f32 %v1106, %v1108
        %v1110 = vadd.f32 %v1106, %v1109
        %vm1111 = vweird.f32 %v1106
        %v1112 = vsel %vm1111, %v1106, %v1110
        %v1113 = vmul.f32 %v1103, %v1112
        %v1114 = vmul.f32 %v1105, %v1112
        %v1115 = vsub.f32 %v1100, %v1113
        %v1116 = vsub.f32 %v1101, %v1114
        %v1117 = vmul.f32 %v1115, %v1115
        %v1118 = vmul.f32 %v1116, %v1116
        %1119 = vadd.xlane.f32.xlu0 %v1117
        %v1120 = vpop.xlane.xlu0 %1119
        %1121 = vadd.xlane.f32.xlu0 %v1118
        %v1122 = vpop.xlane.xlu0 %1121
        %v1123 = vmul.f32 %v1120, %v1112
        %v1124 = vmul.f32 %v1122, %v1112
        %v1125 = vadd.f32 %v1123, 1e-05
        %v1126 = vadd.f32 %v1124, 1e-05
        %v1127 = vrsqrt.pop %v1125
        %v1128 = vmul.f32 %v1127, %v1125
        %v1129 = vmul.f32 %v1128, %v1127
        %v1130 = vmul.f32 0.5, %v1129
        %v1131 = vsub.f32 1.5, %v1130
        %v1132 = vmul.f32 %v1127, %v1131
        %vm1133 = vweird.f32 %v1125
        %vm1134 = vweird.f32 %v1127
        %vm1135 = vmor %vm1133, %vm1134
        %v1136 = vsel %vm1135, %v1127, %v1132
        %v1137 = vrsqrt.pop %v1126
        %v1138 = vmul.f32 %v1137, %v1126
        %v1139 = vmul.f32 %v1138, %v1137
        %v1140 = vmul.f32 0.5, %v1139
        %v1141 = vsub.f32 1.5, %v1140
        %v1142 = vmul.f32 %v1137, %v1141
        %vm1143 = vweird.f32 %v1126
        %vm1144 = vweird.f32 %v1137
        %vm1145 = vmor %vm1143, %vm1144
        %v1146 = vsel %vm1145, %v1137, %v1142
        %v1147 = vmul.f32 %v1115, %v1136
        %v1148 = vmul.f32 %v1116, %v1146
        %v1149 = vld [vmem:[%s6] sm:$0x1]
        %v1151 = vperm.slane %v1149, 0
        %v1153 = vmul.f32 %v1147, %v1151
        %v1154 = vmul.f32 %v1148, %v1151
        %v1155 = vld [vmem:[%s7] sm:$0x1]
        %v1157 = vperm.slane %v1155, 0
        %v1159 = vadd.f32 %v1153, %v1157
        %v1160 = vadd.f32 %v1154, %v1157
        %1161 = vst [vmem:[%s348] sm:$0xff] %v1159
        %1162 = vst [vmem:[%s348 + $0x8] sm:$0xff] %v1160
        %s1163 = sand.u32 %s205, 1
        %s1164 = scalar_lea.sflag [#allocation4], %s1163
        %s1165 = sand.u32 %s205, 1
        %s1166 = smul.addr %s1165, 16
        %s1167 = scalar_lea.vmem [#allocation8], %s1166
        // Predicated region
        $region65: #{tpu_custom_call.1} parent=51 // pred_check
          %p1168 = pneg %p215
        $region66: #{tpu_custom_call.1} parent=51 // pred_check_branch
          %1170 = sbr.rel (%p1168) target = $region68
        $region67: #{tpu_custom_call.1} parent=51 // pred_region
          %1172 = vsyncadd %s1164, 0
          %s1173 = smul.addr %s24, 2
          %s1174 = smul.addr %s1173, 8
          %s1175 = scalar_lea.hbm %s8, %s1174
          %s1176 = sshll.u32 %s1167, 4
          %s1177 = int_to_ptr.vmem [resolvable:$true] %s1176
          %s1178 = sshll.u32 %s1175, 4
          %s1179 = int_to_ptr.hbm [resolvable:$true] %s1178
          %1184 = dma.vmem_to_hbm [thread:$0]  %s1177, 256, %s1179, %s1164, 128, 128, 8
        $region68: #{tpu_custom_call.1} parent=51 // pred_fallthru
          _
      $region52: #{tpu_custom_call.1} parent=5 // pred_fallthru
        _
      %p1185 = scmp.le.s32.totalorder 2, %s19
      // Predicated region
      $region69: #{tpu_custom_call.1} parent=5 // pred_check
        %p1186 = pneg %p1185
      $region70: #{tpu_custom_call.1} parent=5 // pred_check_branch
        %1188 = sbr.rel (%p1186) target = $region72
      $region71: #{tpu_custom_call.1} parent=5 // pred_region
        %s1189 = ssub.s32 %s19, 2
        // Predicated region
        $region73: #{tpu_custom_call.1} parent=71 // pred_check
          %p1190 = pneg %p221
        $region74: #{tpu_custom_call.1} parent=71 // pred_check_branch
          %1192 = sbr.rel (%p1190) target = $region76
        $region75: #{tpu_custom_call.1} parent=71 // pred_region
          %s1193 = sand.u32 %s206, 1
          %s1194 = scalar_lea.sflag [#allocation4], %s1193
          %s1195 = sand.u32 %s206, 1
          %s1196 = smul.addr %s1195, 16
          %s1197 = scalar_lea.vmem [#allocation8], %s1196
          %1199 = dma.done %s1194, 256
        $region76: #{tpu_custom_call.1} parent=71 // pred_fallthru
          _
      $region72: #{tpu_custom_call.1} parent=5 // pred_fallthru
        _
    $region6: #{tpu_custom_call.1} parent=1 // loop_footer
      %s23 = sadd.s32 1, %s19
    $region7: #{tpu_custom_call.1} parent=1 // loop_footer_branch
      %18 = sbr.rel target = $region3
    $region8: #{tpu_custom_call.1} parent=1 // loop_exit
      _
    %1200 = vsyncpa [#allocation3], 1
    %s1201 = scalar_lea.sflag [#allocation3], 1
    %1202 = vsyncpa %s1201, 1
    %1203 = vsyncpa [#allocation6], 1
    %1204 = vsyncpa [#allocation4], 1
    %s1205 = scalar_lea.sflag [#allocation4], 1
    %1206 = vsyncpa %s1205, 1

</llo_original>
